<compile_context>
chip_gen: v7x
topology: tpu7x:2x2x1
jax: 0.10.0
libtpu: 0.0.40
codegen_flags: <defaults>
</compile_context>

<pallas_src>
import jax
import jax.numpy as jnp
from jax import lax
from jax.experimental import pallas as pl
from jax.experimental.pallas import tpu as pltpu


INPUT_DIM = 5        # vocab size
EMBED_DIM = 32
HIDDEN_DIM = 50
OUTPUT_DIM = 10

HIDDEN_PAD = 128     # lane-aligned hidden: each gate block = one 128-lane tile
OUTPUT_PAD = 128     # lane-dense output slab
VOCAB_PAD = 8        # sublane-aligned gate-table rows


def lstm_kernel(ids_ref, gtab_ref, whh_ref, wout_ref, bout_ref, y_ref):
    # ids_ref  : SMEM (T, B) int32   token ids
    # gtab_ref : VMEM (VOCAB_PAD, 4*HP)  folded  emb @ W_ih + bias, gates [i,f,o,g]
    # whh_ref  : VMEM (HP, 4*HP)     recurrent weights, gates [i,f,o,g]
    # wout_ref : VMEM (HP, OP)       output head
    # bout_ref : VMEM (1, OP)
    # y_ref    : VMEM (B, OP)        lane-dense output slab
    T, B = ids_ref.shape
    HP = HIDDEN_PAD

    def step(t, carry):
        h, c = carry
        # In-kernel token gather from the tiny resident table (no HBM x_proj):
        # one dynamic sublane slice per batch row, concatenated to (B, 4*HP).
        xproj = jnp.concatenate(
            [gtab_ref[pl.ds(ids_ref[t, b], 1), :] for b in range(B)], axis=0)
        # Only the recurrent term is truly sequential.  Read the Ref here
        # instead of holding a 256 KiB value live for the whole kernel.
        gates = xproj + jnp.dot(h, whh_ref[...],
                                preferred_element_type=jnp.float32)
        # Gates laid out [i | f | o | g]: one contiguous sigmoid over 3*HP,
        # one tanh over the last HP (two EUP chains instead of four).
        sig = jax.nn.sigmoid(gates[:, :3 * HP])
        i_g = sig[:, 0 * HP:1 * HP]
        f_g = sig[:, 1 * HP:2 * HP]
        o_g = sig[:, 2 * HP:3 * HP]
        g_g = jnp.tanh(gates[:, 3 * HP:4 * HP])
        c = f_g * c + i_g * g_g
        h = o_g * jnp.tanh(c)
        return (h, c)

    h0 = jnp.zeros((B, HP), jnp.float32)
    c0 = jnp.zeros((B, HP), jnp.float32)
    # T is tiny here; for long sequences prefer unroll=4..8 (keeps LLO
    # visibility without blowing up instruction memory / live ranges).
    h_last, _ = lax.fori_loop(0, T, step, (h0, c0), unroll=True)

    # Final Linear head on the last hidden state (bias folded in here once).
    y_ref[...] = (jnp.dot(h_last, wout_ref[...],
                          preferred_element_type=jnp.float32)
                  + bout_ref[...]).astype(y_ref.dtype)


def prepare_params(params):
    """One-time padded / folded / reordered parameter prep.

    Call ONCE at init (not per forward).  Returns the tensors the kernel
    consumes directly:
      gate_table (VOCAB_PAD, 4*HP), w_hh_p (HP, 4*HP),
      w_out_p (HP, OP), b_out_p (1, OP)
    """
    emb_table, w_ih, w_hh, bias, w_out, b_out = params
    H, HP, O, OP = HIDDEN_DIM, HIDDEN_PAD, OUTPUT_DIM, OUTPUT_PAD

    def pad_reorder_gates(w, rows):
        # (rows, 4*H) in PyTorch gate order [i, f, g, o]
        #   -> (rows, 4*HP) zero-padded, reordered to [i, f, o, g].
        w4 = w.reshape(rows, 4, H)[:, jnp.array([0, 1, 3, 2]), :]
        return jnp.pad(w4, ((0, 0), (0, 0), (0, HP - H))).reshape(rows, 4 * HP)

    w_ih_p = pad_reorder_gates(w_ih, EMBED_DIM)                      # (E, 4HP)
    bias_p = pad_reorder_gates(bias, 1)                              # (1, 4HP)

    # Fold embedding lookup + x @ W_ih + bias into one tiny gate table.
    gate_table = emb_table @ w_ih_p + bias_p                         # (V, 4HP)
    gate_table = jnp.pad(gate_table, ((0, VOCAB_PAD - INPUT_DIM), (0, 0)))

    w_hh_p = jnp.pad(pad_reorder_gates(w_hh, H), ((0, HP - H), (0, 0)))
    w_out_p = jnp.pad(w_out, ((0, HP - H), (0, OP - O)))
    b_out_p = jnp.pad(b_out, ((0, 0), (0, OP - O)))

    return (gate_table, w_hh_p, w_out_p, b_out_p)


def lstm_forward(sentence, prepped):
    """sentence: (T, B) int32 token ids.  prepped: prepare_params() output.

    Returns (B, OUTPUT_DIM) float32.
    """
    gate_table, w_hh_p, w_out_p, b_out_p = prepped
    T, B = sentence.shape

    y_pad = pl.pallas_call(
        lstm_kernel,
        out_shape=jax.ShapeDtypeStruct((B, OUTPUT_PAD), jnp.float32),
        in_specs=[
            pl.BlockSpec(memory_space=pltpu.MemorySpace.SMEM),   # token ids
            pl.BlockSpec(memory_space=pltpu.MemorySpace.VMEM),   # gate table
            pl.BlockSpec(memory_space=pltpu.MemorySpace.VMEM),   # W_hh
            pl.BlockSpec(memory_space=pltpu.MemorySpace.VMEM),   # W_out
            pl.BlockSpec(memory_space=pltpu.MemorySpace.VMEM),   # b_out
        ],
        out_specs=pl.BlockSpec(memory_space=pltpu.MemorySpace.VMEM),
    )(sentence, gate_table, w_hh_p, w_out_p, b_out_p)

    return y_pad[:, :OUTPUT_DIM]


def init_params(key):
    """Deterministic parameter init mirroring the PyTorch module's shapes."""
    k_emb, k_wih, k_whh, k_bih, k_bhh, k_wo, k_bo = jax.random.split(key, 7)
    H, E, O, V = HIDDEN_DIM, EMBED_DIM, OUTPUT_DIM, INPUT_DIM

    # nn.Embedding default: N(0, 1)
    emb_table = jax.random.normal(k_emb, (V, E), jnp.float32)

    # nn.LSTM default: U(-1/sqrt(H), 1/sqrt(H)); gate order i, f, g, o.
    s = 1.0 / jnp.sqrt(jnp.float32(H))
    w_ih = jax.random.uniform(k_wih, (E, 4 * H), jnp.float32, -s, s)
    w_hh = jax.random.uniform(k_whh, (H, 4 * H), jnp.float32, -s, s)
    b_ih = jax.random.uniform(k_bih, (4 * H,), jnp.float32, -s, s)
    b_hh = jax.random.uniform(k_bhh, (4 * H,), jnp.float32, -s, s)
    bias = (b_ih + b_hh).reshape(1, 4 * H)

    # nn.Linear default: U(-1/sqrt(fan_in), 1/sqrt(fan_in))
    so = 1.0 / jnp.sqrt(jnp.float32(H))
    w_out = jax.random.uniform(k_wo, (H, O), jnp.float32, -so, so)
    b_out = jax.random.uniform(k_bo, (1, O), jnp.float32, -so, so)

    return (emb_table, w_ih, w_hh, bias, w_out, b_out)


def reference_forward(sentence, params):
    """Pure-JAX reference of the same forward pass (for sanity check)."""
    emb_table, w_ih, w_hh, bias, w_out, b_out = params
    x = jnp.take(emb_table, sentence, axis=0)   # (T, B, E)
    H = HIDDEN_DIM
    B = sentence.shape[1]

    def step(carry, x_t):
        h, c = carry
        gates = x_t @ w_ih + h @ w_hh + bias[0]
        i = jax.nn.sigmoid(gates[:, 0 * H:1 * H])
        f = jax.nn.sigmoid(gates[:, 1 * H:2 * H])
        g = jnp.tanh(gates[:, 2 * H:3 * H])
        o = jax.nn.sigmoid(gates[:, 3 * H:4 * H])
        c = f * c + i * g
        h = o * jnp.tanh(c)
        return (h, c), None

    h0 = jnp.zeros((B, H), jnp.float32)
    c0 = jnp.zeros((B, H), jnp.float32)
    (h_last, _), _ = jax.lax.scan(step, (h0, c0), x)
    return h_last @ w_out + b_out


if __name__ == "__main__":
    key = jax.random.PRNGKey(0)
    k_par, k_tok = jax.random.split(key)

    batch_size = 2
    seq_len = 8

    params = init_params(k_par)
    # One-time, init-side folding (kept out of the per-forward path).
    prepped = jax.block_until_ready(prepare_params(params))

    sentence = jax.random.randint(k_tok, (seq_len, batch_size), 0, INPUT_DIM,
                                  dtype=jnp.int32)

    y = lstm_forward(sentence, prepped)
    y = jax.block_until_ready(y)

    y_ref = reference_forward(sentence, params)
    assert y.shape == (batch_size, OUTPUT_DIM)
    assert jnp.allclose(y, y_ref, atol=1e-4, rtol=1e-4)

    print("KERNEL_OK")
</pallas_src>

<mosaic_0001>
module attributes {stable_mosaic.version = 11 : i64} {
  func.func @lstm_kernel(%arg0: memref<8x2xi32, #tpu.memory_space<smem>>, %arg1: memref<8x512xf32, #tpu.memory_space<vmem>>, %arg2: memref<128x512xf32, #tpu.memory_space<vmem>>, %arg3: memref<128x128xf32, #tpu.memory_space<vmem>>, %arg4: memref<1x128xf32, #tpu.memory_space<vmem>>, %arg5: memref<2x128xf32, #tpu.memory_space<vmem>>) attributes {dimension_semantics = [], scalar_prefetch = 0 : i64, scratch_operands = 0 : i64, tpu.core_type = #tpu.core_type<tc>} {
    %cst = arith.constant 0.000000e+00 : f32
    %0 = vector.broadcast %cst : f32 to vector<2x128xf32>
    %cst_0 = arith.constant 0.000000e+00 : f32
    %1 = vector.broadcast %cst_0 : f32 to vector<2x128xf32>
    %c0_i32 = arith.constant 0 : i32
    %2 = arith.index_cast %c0_i32 : i32 to index
    %c0 = arith.constant 0 : index
    %3 = memref.load %arg0[%2, %c0] : memref<8x2xi32, #tpu.memory_space<smem>>
    %4 = arith.index_cast %3 : i32 to index
    %c0_1 = arith.constant 0 : index
    %5 = vector.load %arg1[%4, %c0_1] : memref<8x512xf32, #tpu.memory_space<vmem>>, vector<1x512xf32>
    %6 = arith.index_cast %c0_i32 : i32 to index
    %c1 = arith.constant 1 : index
    %7 = memref.load %arg0[%6, %c1] : memref<8x2xi32, #tpu.memory_space<smem>>
    %8 = arith.index_cast %7 : i32 to index
    %c0_2 = arith.constant 0 : index
    %9 = vector.load %arg1[%8, %c0_2] : memref<8x512xf32, #tpu.memory_space<vmem>>, vector<1x512xf32>
    %10 = tpu.concatenate %5, %9 in 0 : vector<1x512xf32>, vector<1x512xf32> -> vector<2x512xf32>
    %c0_3 = arith.constant 0 : index
    %c0_4 = arith.constant 0 : index
    %11 = vector.load %arg2[%c0_3, %c0_4] : memref<128x512xf32, #tpu.memory_space<vmem>>, vector<128x512xf32>
    %cst_5 = arith.constant dense<0.000000e+00> : vector<2x512xf32>
    %12 = tpu.matmul %0, %11, %cst_5 {dimension_numbers = #tpu.dot_dimension_numbers<[1], [0], [0], [1], [0, 0, 1, 1], [], []>} : vector<2x128xf32>, vector<128x512xf32>, vector<2x512xf32> -> vector<2x512xf32>
    %13 = arith.addf %10, %12 : vector<2x512xf32>
    %14 = vector.extract_strided_slice %13 {offsets = [0, 0], sizes = [2, 384], strides = [1, 1]} : vector<2x512xf32> to vector<2x384xf32>
    %15 = arith.negf %14 : vector<2x384xf32>
    %16 = math.exp %15 : vector<2x384xf32>
    %cst_6 = arith.constant 1.000000e+00 : f32
    %17 = vector.broadcast %cst_6 : f32 to vector<2x384xf32>
    %18 = arith.addf %17, %16 : vector<2x384xf32>
    %19 = arith.divf %17, %18 : vector<2x384xf32>
    %20 = vector.extract_strided_slice %19 {offsets = [0, 0], sizes = [2, 128], strides = [1, 1]} : vector<2x384xf32> to vector<2x128xf32>
    %21 = vector.extract_strided_slice %19 {offsets = [0, 128], sizes = [2, 128], strides = [1, 1]} : vector<2x384xf32> to vector<2x128xf32>
    %22 = vector.extract_strided_slice %19 {offsets = [0, 256], sizes = [2, 128], strides = [1, 1]} : vector<2x384xf32> to vector<2x128xf32>
    %23 = vector.extract_strided_slice %13 {offsets = [0, 384], sizes = [2, 128], strides = [1, 1]} : vector<2x512xf32> to vector<2x128xf32>
    %24 = math.tanh %23 : vector<2x128xf32>
    %25 = arith.mulf %21, %1 : vector<2x128xf32>
    %26 = arith.mulf %20, %24 : vector<2x128xf32>
    %27 = arith.addf %25, %26 : vector<2x128xf32>
    %28 = math.tanh %27 : vector<2x128xf32>
    %29 = arith.mulf %22, %28 : vector<2x128xf32>
    %c1_i32 = arith.constant 1 : i32
    %30 = arith.index_cast %c1_i32 : i32 to index
    %c0_7 = arith.constant 0 : index
    %31 = memref.load %arg0[%30, %c0_7] : memref<8x2xi32, #tpu.memory_space<smem>>
    %32 = arith.index_cast %31 : i32 to index
    %c0_8 = arith.constant 0 : index
    %33 = vector.load %arg1[%32, %c0_8] : memref<8x512xf32, #tpu.memory_space<vmem>>, vector<1x512xf32>
    %34 = arith.index_cast %c1_i32 : i32 to index
    %c1_9 = arith.constant 1 : index
    %35 = memref.load %arg0[%34, %c1_9] : memref<8x2xi32, #tpu.memory_space<smem>>
    %36 = arith.index_cast %35 : i32 to index
    %c0_10 = arith.constant 0 : index
    %37 = vector.load %arg1[%36, %c0_10] : memref<8x512xf32, #tpu.memory_space<vmem>>, vector<1x512xf32>
    %38 = tpu.concatenate %33, %37 in 0 : vector<1x512xf32>, vector<1x512xf32> -> vector<2x512xf32>
    %c0_11 = arith.constant 0 : index
    %c0_12 = arith.constant 0 : index
    %39 = vector.load %arg2[%c0_11, %c0_12] : memref<128x512xf32, #tpu.memory_space<vmem>>, vector<128x512xf32>
    %cst_13 = arith.constant dense<0.000000e+00> : vector<2x512xf32>
    %40 = tpu.matmul %29, %39, %cst_13 {dimension_numbers = #tpu.dot_dimension_numbers<[1], [0], [0], [1], [0, 0, 1, 1], [], []>} : vector<2x128xf32>, vector<128x512xf32>, vector<2x512xf32> -> vector<2x512xf32>
    %41 = arith.addf %38, %40 : vector<2x512xf32>
    %42 = vector.extract_strided_slice %41 {offsets = [0, 0], sizes = [2, 384], strides = [1, 1]} : vector<2x512xf32> to vector<2x384xf32>
    %43 = arith.negf %42 : vector<2x384xf32>
    %44 = math.exp %43 : vector<2x384xf32>
    %cst_14 = arith.constant 1.000000e+00 : f32
    %45 = vector.broadcast %cst_14 : f32 to vector<2x384xf32>
    %46 = arith.addf %45, %44 : vector<2x384xf32>
    %47 = arith.divf %45, %46 : vector<2x384xf32>
    %48 = vector.extract_strided_slice %47 {offsets = [0, 0], sizes = [2, 128], strides = [1, 1]} : vector<2x384xf32> to vector<2x128xf32>
    %49 = vector.extract_strided_slice %47 {offsets = [0, 128], sizes = [2, 128], strides = [1, 1]} : vector<2x384xf32> to vector<2x128xf32>
    %50 = vector.extract_strided_slice %47 {offsets = [0, 256], sizes = [2, 128], strides = [1, 1]} : vector<2x384xf32> to vector<2x128xf32>
    %51 = vector.extract_strided_slice %41 {offsets = [0, 384], sizes = [2, 128], strides = [1, 1]} : vector<2x512xf32> to vector<2x128xf32>
    %52 = math.tanh %51 : vector<2x128xf32>
    %53 = arith.mulf %49, %27 : vector<2x128xf32>
    %54 = arith.mulf %48, %52 : vector<2x128xf32>
    %55 = arith.addf %53, %54 : vector<2x128xf32>
    %56 = math.tanh %55 : vector<2x128xf32>
    %57 = arith.mulf %50, %56 : vector<2x128xf32>
    %c2_i32 = arith.constant 2 : i32
    %58 = arith.index_cast %c2_i32 : i32 to index
    %c0_15 = arith.constant 0 : index
    %59 = memref.load %arg0[%58, %c0_15] : memref<8x2xi32, #tpu.memory_space<smem>>
    %60 = arith.index_cast %59 : i32 to index
    %c0_16 = arith.constant 0 : index
    %61 = vector.load %arg1[%60, %c0_16] : memref<8x512xf32, #tpu.memory_space<vmem>>, vector<1x512xf32>
    %62 = arith.index_cast %c2_i32 : i32 to index
    %c1_17 = arith.constant 1 : index
    %63 = memref.load %arg0[%62, %c1_17] : memref<8x2xi32, #tpu.memory_space<smem>>
    %64 = arith.index_cast %63 : i32 to index
    %c0_18 = arith.constant 0 : index
    %65 = vector.load %arg1[%64, %c0_18] : memref<8x512xf32, #tpu.memory_space<vmem>>, vector<1x512xf32>
    %66 = tpu.concatenate %61, %65 in 0 : vector<1x512xf32>, vector<1x512xf32> -> vector<2x512xf32>
    %c0_19 = arith.constant 0 : index
    %c0_20 = arith.constant 0 : index
    %67 = vector.load %arg2[%c0_19, %c0_20] : memref<128x512xf32, #tpu.memory_space<vmem>>, vector<128x512xf32>
    %cst_21 = arith.constant dense<0.000000e+00> : vector<2x512xf32>
    %68 = tpu.matmul %57, %67, %cst_21 {dimension_numbers = #tpu.dot_dimension_numbers<[1], [0], [0], [1], [0, 0, 1, 1], [], []>} : vector<2x128xf32>, vector<128x512xf32>, vector<2x512xf32> -> vector<2x512xf32>
    %69 = arith.addf %66, %68 : vector<2x512xf32>
    %70 = vector.extract_strided_slice %69 {offsets = [0, 0], sizes = [2, 384], strides = [1, 1]} : vector<2x512xf32> to vector<2x384xf32>
    %71 = arith.negf %70 : vector<2x384xf32>
    %72 = math.exp %71 : vector<2x384xf32>
    %cst_22 = arith.constant 1.000000e+00 : f32
    %73 = vector.broadcast %cst_22 : f32 to vector<2x384xf32>
    %74 = arith.addf %73, %72 : vector<2x384xf32>
    %75 = arith.divf %73, %74 : vector<2x384xf32>
    %76 = vector.extract_strided_slice %75 {offsets = [0, 0], sizes = [2, 128], strides = [1, 1]} : vector<2x384xf32> to vector<2x128xf32>
    %77 = vector.extract_strided_slice %75 {offsets = [0, 128], sizes = [2, 128], strides = [1, 1]} : vector<2x384xf32> to vector<2x128xf32>
    %78 = vector.extract_strided_slice %75 {offsets = [0, 256], sizes = [2, 128], strides = [1, 1]} : vector<2x384xf32> to vector<2x128xf32>
    %79 = vector.extract_strided_slice %69 {offsets = [0, 384], sizes = [2, 128], strides = [1, 1]} : vector<2x512xf32> to vector<2x128xf32>
    %80 = math.tanh %79 : vector<2x128xf32>
    %81 = arith.mulf %77, %55 : vector<2x128xf32>
    %82 = arith.mulf %76, %80 : vector<2x128xf32>
    %83 = arith.addf %81, %82 : vector<2x128xf32>
    %84 = math.tanh %83 : vector<2x128xf32>
    %85 = arith.mulf %78, %84 : vector<2x128xf32>
    %c3_i32 = arith.constant 3 : i32
    %86 = arith.index_cast %c3_i32 : i32 to index
    %c0_23 = arith.constant 0 : index
    %87 = memref.load %arg0[%86, %c0_23] : memref<8x2xi32, #tpu.memory_space<smem>>
    %88 = arith.index_cast %87 : i32 to index
    %c0_24 = arith.constant 0 : index
    %89 = vector.load %arg1[%88, %c0_24] : memref<8x512xf32, #tpu.memory_space<vmem>>, vector<1x512xf32>
    %90 = arith.index_cast %c3_i32 : i32 to index
    %c1_25 = arith.constant 1 : index
    %91 = memref.load %arg0[%90, %c1_25] : memref<8x2xi32, #tpu.memory_space<smem>>
    %92 = arith.index_cast %91 : i32 to index
    %c0_26 = arith.constant 0 : index
    %93 = vector.load %arg1[%92, %c0_26] : memref<8x512xf32, #tpu.memory_space<vmem>>, vector<1x512xf32>
    %94 = tpu.concatenate %89, %93 in 0 : vector<1x512xf32>, vector<1x512xf32> -> vector<2x512xf32>
    %c0_27 = arith.constant 0 : index
    %c0_28 = arith.constant 0 : index
    %95 = vector.load %arg2[%c0_27, %c0_28] : memref<128x512xf32, #tpu.memory_space<vmem>>, vector<128x512xf32>
    %cst_29 = arith.constant dense<0.000000e+00> : vector<2x512xf32>
    %96 = tpu.matmul %85, %95, %cst_29 {dimension_numbers = #tpu.dot_dimension_numbers<[1], [0], [0], [1], [0, 0, 1, 1], [], []>} : vector<2x128xf32>, vector<128x512xf32>, vector<2x512xf32> -> vector<2x512xf32>
    %97 = arith.addf %94, %96 : vector<2x512xf32>
    %98 = vector.extract_strided_slice %97 {offsets = [0, 0], sizes = [2, 384], strides = [1, 1]} : vector<2x512xf32> to vector<2x384xf32>
    %99 = arith.negf %98 : vector<2x384xf32>
    %100 = math.exp %99 : vector<2x384xf32>
    %cst_30 = arith.constant 1.000000e+00 : f32
    %101 = vector.broadcast %cst_30 : f32 to vector<2x384xf32>
    %102 = arith.addf %101, %100 : vector<2x384xf32>
    %103 = arith.divf %101, %102 : vector<2x384xf32>
    %104 = vector.extract_strided_slice %103 {offsets = [0, 0], sizes = [2, 128], strides = [1, 1]} : vector<2x384xf32> to vector<2x128xf32>
    %105 = vector.extract_strided_slice %103 {offsets = [0, 128], sizes = [2, 128], strides = [1, 1]} : vector<2x384xf32> to vector<2x128xf32>
    %106 = vector.extract_strided_slice %103 {offsets = [0, 256], sizes = [2, 128], strides = [1, 1]} : vector<2x384xf32> to vector<2x128xf32>
    %107 = vector.extract_strided_slice %97 {offsets = [0, 384], sizes = [2, 128], strides = [1, 1]} : vector<2x512xf32> to vector<2x128xf32>
    %108 = math.tanh %107 : vector<2x128xf32>
    %109 = arith.mulf %105, %83 : vector<2x128xf32>
    %110 = arith.mulf %104, %108 : vector<2x128xf32>
    %111 = arith.addf %109, %110 : vector<2x128xf32>
    %112 = math.tanh %111 : vector<2x128xf32>
    %113 = arith.mulf %106, %112 : vector<2x128xf32>
    %c4_i32 = arith.constant 4 : i32
    %114 = arith.index_cast %c4_i32 : i32 to index
    %c0_31 = arith.constant 0 : index
    %115 = memref.load %arg0[%114, %c0_31] : memref<8x2xi32, #tpu.memory_space<smem>>
    %116 = arith.index_cast %115 : i32 to index
    %c0_32 = arith.constant 0 : index
    %117 = vector.load %arg1[%116, %c0_32] : memref<8x512xf32, #tpu.memory_space<vmem>>, vector<1x512xf32>
    %118 = arith.index_cast %c4_i32 : i32 to index
    %c1_33 = arith.constant 1 : index
    %119 = memref.load %arg0[%118, %c1_33] : memref<8x2xi32, #tpu.memory_space<smem>>
    %120 = arith.index_cast %119 : i32 to index
    %c0_34 = arith.constant 0 : index
    %121 = vector.load %arg1[%120, %c0_34] : memref<8x512xf32, #tpu.memory_space<vmem>>, vector<1x512xf32>
    %122 = tpu.concatenate %117, %121 in 0 : vector<1x512xf32>, vector<1x512xf32> -> vector<2x512xf32>
    %c0_35 = arith.constant 0 : index
    %c0_36 = arith.constant 0 : index
    %123 = vector.load %arg2[%c0_35, %c0_36] : memref<128x512xf32, #tpu.memory_space<vmem>>, vector<128x512xf32>
    %cst_37 = arith.constant dense<0.000000e+00> : vector<2x512xf32>
    %124 = tpu.matmul %113, %123, %cst_37 {dimension_numbers = #tpu.dot_dimension_numbers<[1], [0], [0], [1], [0, 0, 1, 1], [], []>} : vector<2x128xf32>, vector<128x512xf32>, vector<2x512xf32> -> vector<2x512xf32>
    %125 = arith.addf %122, %124 : vector<2x512xf32>
    %126 = vector.extract_strided_slice %125 {offsets = [0, 0], sizes = [2, 384], strides = [1, 1]} : vector<2x512xf32> to vector<2x384xf32>
    %127 = arith.negf %126 : vector<2x384xf32>
    %128 = math.exp %127 : vector<2x384xf32>
    %cst_38 = arith.constant 1.000000e+00 : f32
    %129 = vector.broadcast %cst_38 : f32 to vector<2x384xf32>
    %130 = arith.addf %129, %128 : vector<2x384xf32>
    %131 = arith.divf %129, %130 : vector<2x384xf32>
    %132 = vector.extract_strided_slice %131 {offsets = [0, 0], sizes = [2, 128], strides = [1, 1]} : vector<2x384xf32> to vector<2x128xf32>
    %133 = vector.extract_strided_slice %131 {offsets = [0, 128], sizes = [2, 128], strides = [1, 1]} : vector<2x384xf32> to vector<2x128xf32>
    %134 = vector.extract_strided_slice %131 {offsets = [0, 256], sizes = [2, 128], strides = [1, 1]} : vector<2x384xf32> to vector<2x128xf32>
    %135 = vector.extract_strided_slice %125 {offsets = [0, 384], sizes = [2, 128], strides = [1, 1]} : vector<2x512xf32> to vector<2x128xf32>
    %136 = math.tanh %135 : vector<2x128xf32>
    %137 = arith.mulf %133, %111 : vector<2x128xf32>
    %138 = arith.mulf %132, %136 : vector<2x128xf32>
    %139 = arith.addf %137, %138 : vector<2x128xf32>
    %140 = math.tanh %139 : vector<2x128xf32>
    %141 = arith.mulf %134, %140 : vector<2x128xf32>
    %c5_i32 = arith.constant 5 : i32
    %142 = arith.index_cast %c5_i32 : i32 to index
    %c0_39 = arith.constant 0 : index
    %143 = memref.load %arg0[%142, %c0_39] : memref<8x2xi32, #tpu.memory_space<smem>>
    %144 = arith.index_cast %143 : i32 to index
    %c0_40 = arith.constant 0 : index
    %145 = vector.load %arg1[%144, %c0_40] : memref<8x512xf32, #tpu.memory_space<vmem>>, vector<1x512xf32>
    %146 = arith.index_cast %c5_i32 : i32 to index
    %c1_41 = arith.constant 1 : index
    %147 = memref.load %arg0[%146, %c1_41] : memref<8x2xi32, #tpu.memory_space<smem>>
    %148 = arith.index_cast %147 : i32 to index
    %c0_42 = arith.constant 0 : index
    %149 = vector.load %arg1[%148, %c0_42] : memref<8x512xf32, #tpu.memory_space<vmem>>, vector<1x512xf32>
    %150 = tpu.concatenate %145, %149 in 0 : vector<1x512xf32>, vector<1x512xf32> -> vector<2x512xf32>
    %c0_43 = arith.constant 0 : index
    %c0_44 = arith.constant 0 : index
    %151 = vector.load %arg2[%c0_43, %c0_44] : memref<128x512xf32, #tpu.memory_space<vmem>>, vector<128x512xf32>
    %cst_45 = arith.constant dense<0.000000e+00> : vector<2x512xf32>
    %152 = tpu.matmul %141, %151, %cst_45 {dimension_numbers = #tpu.dot_dimension_numbers<[1], [0], [0], [1], [0, 0, 1, 1], [], []>} : vector<2x128xf32>, vector<128x512xf32>, vector<2x512xf32> -> vector<2x512xf32>
    %153 = arith.addf %150, %152 : vector<2x512xf32>
    %154 = vector.extract_strided_slice %153 {offsets = [0, 0], sizes = [2, 384], strides = [1, 1]} : vector<2x512xf32> to vector<2x384xf32>
    %155 = arith.negf %154 : vector<2x384xf32>
    %156 = math.exp %155 : vector<2x384xf32>
    %cst_46 = arith.constant 1.000000e+00 : f32
    %157 = vector.broadcast %cst_46 : f32 to vector<2x384xf32>
    %158 = arith.addf %157, %156 : vector<2x384xf32>
    %159 = arith.divf %157, %158 : vector<2x384xf32>
    %160 = vector.extract_strided_slice %159 {offsets = [0, 0], sizes = [2, 128], strides = [1, 1]} : vector<2x384xf32> to vector<2x128xf32>
    %161 = vector.extract_strided_slice %159 {offsets = [0, 128], sizes = [2, 128], strides = [1, 1]} : vector<2x384xf32> to vector<2x128xf32>
    %162 = vector.extract_strided_slice %159 {offsets = [0, 256], sizes = [2, 128], strides = [1, 1]} : vector<2x384xf32> to vector<2x128xf32>
    %163 = vector.extract_strided_slice %153 {offsets = [0, 384], sizes = [2, 128], strides = [1, 1]} : vector<2x512xf32> to vector<2x128xf32>
    %164 = math.tanh %163 : vector<2x128xf32>
    %165 = arith.mulf %161, %139 : vector<2x128xf32>
    %166 = arith.mulf %160, %164 : vector<2x128xf32>
    %167 = arith.addf %165, %166 : vector<2x128xf32>
    %168 = math.tanh %167 : vector<2x128xf32>
    %169 = arith.mulf %162, %168 : vector<2x128xf32>
    %c6_i32 = arith.constant 6 : i32
    %170 = arith.index_cast %c6_i32 : i32 to index
    %c0_47 = arith.constant 0 : index
    %171 = memref.load %arg0[%170, %c0_47] : memref<8x2xi32, #tpu.memory_space<smem>>
    %172 = arith.index_cast %171 : i32 to index
    %c0_48 = arith.constant 0 : index
    %173 = vector.load %arg1[%172, %c0_48] : memref<8x512xf32, #tpu.memory_space<vmem>>, vector<1x512xf32>
    %174 = arith.index_cast %c6_i32 : i32 to index
    %c1_49 = arith.constant 1 : index
    %175 = memref.load %arg0[%174, %c1_49] : memref<8x2xi32, #tpu.memory_space<smem>>
    %176 = arith.index_cast %175 : i32 to index
    %c0_50 = arith.constant 0 : index
    %177 = vector.load %arg1[%176, %c0_50] : memref<8x512xf32, #tpu.memory_space<vmem>>, vector<1x512xf32>
    %178 = tpu.concatenate %173, %177 in 0 : vector<1x512xf32>, vector<1x512xf32> -> vector<2x512xf32>
    %c0_51 = arith.constant 0 : index
    %c0_52 = arith.constant 0 : index
    %179 = vector.load %arg2[%c0_51, %c0_52] : memref<128x512xf32, #tpu.memory_space<vmem>>, vector<128x512xf32>
    %cst_53 = arith.constant dense<0.000000e+00> : vector<2x512xf32>
    %180 = tpu.matmul %169, %179, %cst_53 {dimension_numbers = #tpu.dot_dimension_numbers<[1], [0], [0], [1], [0, 0, 1, 1], [], []>} : vector<2x128xf32>, vector<128x512xf32>, vector<2x512xf32> -> vector<2x512xf32>
    %181 = arith.addf %178, %180 : vector<2x512xf32>
    %182 = vector.extract_strided_slice %181 {offsets = [0, 0], sizes = [2, 384], strides = [1, 1]} : vector<2x512xf32> to vector<2x384xf32>
    %183 = arith.negf %182 : vector<2x384xf32>
    %184 = math.exp %183 : vector<2x384xf32>
    %cst_54 = arith.constant 1.000000e+00 : f32
    %185 = vector.broadcast %cst_54 : f32 to vector<2x384xf32>
    %186 = arith.addf %185, %184 : vector<2x384xf32>
    %187 = arith.divf %185, %186 : vector<2x384xf32>
    %188 = vector.extract_strided_slice %187 {offsets = [0, 0], sizes = [2, 128], strides = [1, 1]} : vector<2x384xf32> to vector<2x128xf32>
    %189 = vector.extract_strided_slice %187 {offsets = [0, 128], sizes = [2, 128], strides = [1, 1]} : vector<2x384xf32> to vector<2x128xf32>
    %190 = vector.extract_strided_slice %187 {offsets = [0, 256], sizes = [2, 128], strides = [1, 1]} : vector<2x384xf32> to vector<2x128xf32>
    %191 = vector.extract_strided_slice %181 {offsets = [0, 384], sizes = [2, 128], strides = [1, 1]} : vector<2x512xf32> to vector<2x128xf32>
    %192 = math.tanh %191 : vector<2x128xf32>
    %193 = arith.mulf %189, %167 : vector<2x128xf32>
    %194 = arith.mulf %188, %192 : vector<2x128xf32>
    %195 = arith.addf %193, %194 : vector<2x128xf32>
    %196 = math.tanh %195 : vector<2x128xf32>
    %197 = arith.mulf %190, %196 : vector<2x128xf32>
    %c7_i32 = arith.constant 7 : i32
    %198 = arith.index_cast %c7_i32 : i32 to index
    %c0_55 = arith.constant 0 : index
    %199 = memref.load %arg0[%198, %c0_55] : memref<8x2xi32, #tpu.memory_space<smem>>
    %200 = arith.index_cast %199 : i32 to index
    %c0_56 = arith.constant 0 : index
    %201 = vector.load %arg1[%200, %c0_56] : memref<8x512xf32, #tpu.memory_space<vmem>>, vector<1x512xf32>
    %202 = arith.index_cast %c7_i32 : i32 to index
    %c1_57 = arith.constant 1 : index
    %203 = memref.load %arg0[%202, %c1_57] : memref<8x2xi32, #tpu.memory_space<smem>>
    %204 = arith.index_cast %203 : i32 to index
    %c0_58 = arith.constant 0 : index
    %205 = vector.load %arg1[%204, %c0_58] : memref<8x512xf32, #tpu.memory_space<vmem>>, vector<1x512xf32>
    %206 = tpu.concatenate %201, %205 in 0 : vector<1x512xf32>, vector<1x512xf32> -> vector<2x512xf32>
    %c0_59 = arith.constant 0 : index
    %c0_60 = arith.constant 0 : index
    %207 = vector.load %arg2[%c0_59, %c0_60] : memref<128x512xf32, #tpu.memory_space<vmem>>, vector<128x512xf32>
    %cst_61 = arith.constant dense<0.000000e+00> : vector<2x512xf32>
    %208 = tpu.matmul %197, %207, %cst_61 {dimension_numbers = #tpu.dot_dimension_numbers<[1], [0], [0], [1], [0, 0, 1, 1], [], []>} : vector<2x128xf32>, vector<128x512xf32>, vector<2x512xf32> -> vector<2x512xf32>
    %209 = arith.addf %206, %208 : vector<2x512xf32>
    %210 = vector.extract_strided_slice %209 {offsets = [0, 0], sizes = [2, 384], strides = [1, 1]} : vector<2x512xf32> to vector<2x384xf32>
    %211 = arith.negf %210 : vector<2x384xf32>
    %212 = math.exp %211 : vector<2x384xf32>
    %cst_62 = arith.constant 1.000000e+00 : f32
    %213 = vector.broadcast %cst_62 : f32 to vector<2x384xf32>
    %214 = arith.addf %213, %212 : vector<2x384xf32>
    %215 = arith.divf %213, %214 : vector<2x384xf32>
    %216 = vector.extract_strided_slice %215 {offsets = [0, 0], sizes = [2, 128], strides = [1, 1]} : vector<2x384xf32> to vector<2x128xf32>
    %217 = vector.extract_strided_slice %215 {offsets = [0, 128], sizes = [2, 128], strides = [1, 1]} : vector<2x384xf32> to vector<2x128xf32>
    %218 = vector.extract_strided_slice %215 {offsets = [0, 256], sizes = [2, 128], strides = [1, 1]} : vector<2x384xf32> to vector<2x128xf32>
    %219 = vector.extract_strided_slice %209 {offsets = [0, 384], sizes = [2, 128], strides = [1, 1]} : vector<2x512xf32> to vector<2x128xf32>
    %220 = math.tanh %219 : vector<2x128xf32>
    %221 = arith.mulf %217, %195 : vector<2x128xf32>
    %222 = arith.mulf %216, %220 : vector<2x128xf32>
    %223 = arith.addf %221, %222 : vector<2x128xf32>
    %224 = math.tanh %223 : vector<2x128xf32>
    %225 = arith.mulf %218, %224 : vector<2x128xf32>
    %c8_i32 = arith.constant 8 : i32
    %c0_63 = arith.constant 0 : index
    %c0_64 = arith.constant 0 : index
    %226 = vector.load %arg3[%c0_63, %c0_64] : memref<128x128xf32, #tpu.memory_space<vmem>>, vector<128x128xf32>
    %cst_65 = arith.constant dense<0.000000e+00> : vector<2x128xf32>
    %227 = tpu.matmul %225, %226, %cst_65 {dimension_numbers = #tpu.dot_dimension_numbers<[1], [0], [0], [1], [0, 0, 1, 1], [], []>} : vector<2x128xf32>, vector<128x128xf32>, vector<2x128xf32> -> vector<2x128xf32>
    %c0_66 = arith.constant 0 : index
    %c0_67 = arith.constant 0 : index
    %228 = vector.load %arg4[%c0_66, %c0_67] : memref<1x128xf32, #tpu.memory_space<vmem>>, vector<1x128xf32>
    %229 = vector.broadcast %228 : vector<1x128xf32> to vector<2x128xf32>
    %230 = arith.addf %227, %229 : vector<2x128xf32>
    %c0_68 = arith.constant 0 : index
    %c0_69 = arith.constant 0 : index
    %231 = vector.load %arg5[%c0_68, %c0_69] : memref<2x128xf32, #tpu.memory_space<vmem>>, vector<2x128xf32>
    tpu.vector_store %arg5[%c0_68, %c0_69], %230 {strides = array<i32>} : memref<2x128xf32, #tpu.memory_space<vmem>>, vector<2x128xf32>,
    return
  }
}

</mosaic_0001>

<llo_original>
// kernel: tpu_custom_call.1
$region0: #{tpu_custom_call.1}
  #allocation0 [shape = 'u32[]', space=smem, size = 0x4, offset = 0x4, fixed_abs, tag = 'smem constant byte address 0x4 - core index']
  #allocation1 [shape = 'u32[144,128]{1,0:T(1,128)}', space=vmem, size = 0x12000, scoped, tag = 'internal scratch']
  %s0 = inlined_call_operand.vmem [shape: s32[8,2], index: 0, kind: input, shape index: {}]
  %s1 = inlined_call_operand.hbm [shape: f32[8,512], index: 1, kind: input, shape index: {}]
  %s2 = inlined_call_operand.hbm [shape: f32[128,512], index: 2, kind: input, shape index: {}]
  %s3 = inlined_call_operand.hbm [shape: f32[128,128], index: 3, kind: input, shape index: {}]
  %s4 = inlined_call_operand.vmem [shape: f32[1,128], index: 4, kind: input, shape index: {}]
  %s5 = inlined_call_operand.hbm [shape: f32[2,128], index: 5, kind: output, shape index: {}]
  %s6 = sld [smem:[#allocation0]]
  $region46: #{tpu_custom_call.1} parent=0
    _
  %s8 = ssub.s32 1, %s6
  %s9 = scalar_select 0, %s8, %s6
  $region1: #{tpu_custom_call.1} parent=0
    #allocation2 [shape = 'u8[4096]{0}', space=smem, size = 0x1000, scoped, tag = 'input window, operand 0, single buffered']
    #allocation3 [shape = 's32[1]{0}', space=sflag, size = 0x4, scoped, tag = 'scoped memory for tpu_custom_call.1']
    #allocation4 [shape = 's32[1]{0}', space=sflag, size = 0x4, scoped, tag = 'scoped memory for tpu_custom_call.1']
    #allocation5 [shape = 's32[1]{0}', space=sflag, size = 0x4, scoped, tag = 'scoped memory for tpu_custom_call.1']
    #allocation6 [shape = 'u8[16384]{0}', space=vmem, size = 0x4000, scoped, tag = 'input window, operand 1, single buffered']
    #allocation7 [shape = 'u8[262144]{0}', space=vmem, size = 0x40000, scoped, tag = 'input window, operand 2, single buffered']
    #allocation8 [shape = 's32[1]{0}', space=sflag, size = 0x4, scoped, tag = 'scoped memory for tpu_custom_call.1']
    #allocation9 [shape = 'u8[65536]{0}', space=vmem, size = 0x10000, scoped, tag = 'input window, operand 3, single buffered']
    #allocation10 [shape = 'u8[1024]{0}', space=vmem, size = 0x400, scoped, tag = 'output window, operand 0, single buffered']
    %10 = vsyncpa [#allocation5], 0
    %11 = vsyncpa [#allocation3], 0
    %12 = vsyncpa [#allocation8], 0
    %13 = vsyncpa [#allocation4], 0
    // Predicated region
    $region2: #{tpu_custom_call.1} parent=1 // pred_check
      _
    $region3: #{tpu_custom_call.1} parent=1 // pred_check_branch
      %15 = sbr.rel (0) target = $region5
    $region4: #{tpu_custom_call.1} parent=1 // pred_region
      %s17 = ssub.s32 128, 128
      %18 = vsyncadd [#allocation5], %s17
      %s20 = sshll.u32 %s0, 4
      %s21 = int_to_ptr.vmem [resolvable:$true] %s20
      %23 = dma.vmem_to_smem %s21, 128, [#allocation2], [#allocation5]
    $region5: #{tpu_custom_call.1} parent=1 // pred_fallthru
      _
    // Predicated region
    $region6: #{tpu_custom_call.1} parent=1 // pred_check
      _
    $region7: #{tpu_custom_call.1} parent=1 // pred_check_branch
      %25 = sbr.rel (0) target = $region9
    $region8: #{tpu_custom_call.1} parent=1 // pred_region
      %s27 = ssub.s32 512, 512
      %28 = vsyncadd [#allocation3], %s27
      %s30 = sshll.u32 [#allocation6], 4
      %s31 = int_to_ptr.vmem [resolvable:$true] %s30
      %33 = dma.hbm_to_vmem [thread:$0]  %s1, 512, %s31, [#allocation3]
    $region9: #{tpu_custom_call.1} parent=1 // pred_fallthru
      _
    // Predicated region
    $region10: #{tpu_custom_call.1} parent=1 // pred_check
      _
    $region11: #{tpu_custom_call.1} parent=1 // pred_check_branch
      %35 = sbr.rel (0) target = $region13
    $region12: #{tpu_custom_call.1} parent=1 // pred_region
      %s37 = ssub.s32 8192, 8192
      %38 = vsyncadd [#allocation8], %s37
      %s39 = sshll.u32 [#allocation7], 4
      %s40 = int_to_ptr.vmem [resolvable:$true] %s39
      %45 = dma.hbm_to_vmem [thread:$0]  %s2, 8192, %s40, [#allocation8], 512, 512, 32
    $region13: #{tpu_custom_call.1} parent=1 // pred_fallthru
      _
    // Predicated region
    $region14: #{tpu_custom_call.1} parent=1 // pred_check
      _
    $region15: #{tpu_custom_call.1} parent=1 // pred_check_branch
      %47 = sbr.rel (0) target = $region17
    $region16: #{tpu_custom_call.1} parent=1 // pred_region
      %s49 = ssub.s32 2048, 2048
      %50 = vsyncadd [#allocation8], %s49
      %s51 = sshll.u32 [#allocation9], 4
      %s52 = int_to_ptr.vmem [resolvable:$true] %s51
      %57 = dma.hbm_to_vmem [thread:$0]  %s3, 2048, %s52, [#allocation8], 128, 128, 8
    $region17: #{tpu_custom_call.1} parent=1 // pred_fallthru
      _
    // Predicated region
    $region18: #{tpu_custom_call.1} parent=1 // pred_check
      _
    $region19: #{tpu_custom_call.1} parent=1 // pred_check_branch
      %59 = sbr.rel (0) target = $region21
    $region20: #{tpu_custom_call.1} parent=1 // pred_region
      _
    $region21: #{tpu_custom_call.1} parent=1 // pred_fallthru
      _
    // Predicated region
    $region22: #{tpu_custom_call.1} parent=1 // pred_check
      _
    $region23: #{tpu_custom_call.1} parent=1 // pred_check_branch
      %61 = sbr.rel (0) target = $region25
    $region24: #{tpu_custom_call.1} parent=1 // pred_region
      %62 = dma.done [#allocation5], 128
    $region25: #{tpu_custom_call.1} parent=1 // pred_fallthru
      _
    // Predicated region
    $region26: #{tpu_custom_call.1} parent=1 // pred_check
      _
    $region27: #{tpu_custom_call.1} parent=1 // pred_check_branch
      %64 = sbr.rel (0) target = $region29
    $region28: #{tpu_custom_call.1} parent=1 // pred_region
      %65 = dma.done [#allocation3], 512
    $region29: #{tpu_custom_call.1} parent=1 // pred_fallthru
      _
    // Predicated region
    $region30: #{tpu_custom_call.1} parent=1 // pred_check
      _
    $region31: #{tpu_custom_call.1} parent=1 // pred_check_branch
      %67 = sbr.rel (0) target = $region33
    $region32: #{tpu_custom_call.1} parent=1 // pred_region
      %68 = dma.done [#allocation8], 8192
    $region33: #{tpu_custom_call.1} parent=1 // pred_fallthru
      _
    // Predicated region
    $region34: #{tpu_custom_call.1} parent=1 // pred_check
      _
    $region35: #{tpu_custom_call.1} parent=1 // pred_check_branch
      %70 = sbr.rel (0) target = $region37
    $region36: #{tpu_custom_call.1} parent=1 // pred_region
      %71 = dma.done [#allocation8], 2048
    $region37: #{tpu_custom_call.1} parent=1 // pred_fallthru
      _
    %72 = sfence
    %s73 = sld [smem:[#allocation2]]
    %s74 = sshra.s32 %s73, 3
    %s75 = sand.u32 %s73, 7
    %s76 = sshra.s32 %s73, 3
    %s77 = sand.u32 %s73, 7
    %s78 = smul.u32 %s74, 4
    %s79 = smul.u32 %s78, 8
    %s80 = sadd.s32 %s79, %s77
    %s81 = scalar_lea.vmem [#allocation6], %s80
    %v82 = vld [vmem:[%s81] ss:$8 sm:$0xf]
    %s83 = sld [smem:[#allocation2 + $0x1]]
    %s84 = sshra.s32 %s83, 3
    %s85 = sand.u32 %s83, 7
    %s86 = sshra.s32 %s83, 3
    %s87 = sand.u32 %s83, 7
    %s88 = smul.u32 %s84, 4
    %s89 = smul.u32 %s88, 8
    %s90 = sadd.s32 %s89, %s87
    %s91 = scalar_lea.vmem [#allocation6], %s90
    %v92 = vld [vmem:[%s91] ss:$8 sm:$0xf]
    %v94 = vlaneseq
    %v95 = vshrl.u32 %v94, 7
    %v96 = vsub.s32 0, %v95
    %v97 = vrot.slane %v82, %v96
    %v98 = vlaneseq
    %v99 = vshrl.u32 %v98, 7
    %v100 = vsub.s32 1, %v99
    %v101 = vrot.slane %v82, %v100
    %v102 = vlaneseq
    %v103 = vshrl.u32 %v102, 7
    %v104 = vsub.s32 2, %v103
    %v105 = vrot.slane %v82, %v104
    %v106 = vlaneseq
    %v107 = vshrl.u32 %v106, 7
    %v108 = vsub.s32 3, %v107
    %v109 = vrot.slane %v82, %v108
    %v115 = vlaneseq
    %v116 = vshrl.u32 %v115, 7
    %v117 = vsub.s32 0, %v116
    %v118 = vrot.slane %v92, %v117
    %v119 = vlaneseq
    %v120 = vshrl.u32 %v119, 7
    %v121 = vsub.s32 1, %v120
    %v122 = vrot.slane %v92, %v121
    %v123 = vlaneseq
    %v124 = vshrl.u32 %v123, 7
    %v125 = vsub.s32 2, %v124
    %v126 = vrot.slane %v92, %v125
    %v127 = vlaneseq
    %v128 = vshrl.u32 %v127, 7
    %v129 = vsub.s32 3, %v128
    %v130 = vrot.slane %v92, %v129
    %vm135 = vcmask 1040384
    %v136 = vsel %vm135, %v97, %v118
    %v137 = vsel %vm135, %v101, %v122
    %v138 = vsel %vm135, %v105, %v126
    %v139 = vsel %vm135, %v109, %v130
    %v140 = vld [vmem:[#allocation7] sm:$0xff]
    %v141 = vld [vmem:[#allocation7 + $0x8] sm:$0xff]
    %v142 = vld [vmem:[#allocation7 + $0x10] sm:$0xff]
    %v143 = vld [vmem:[#allocation7 + $0x18] sm:$0xff]
    %v144 = vld [vmem:[#allocation7 + $0x20] sm:$0xff]
    %v145 = vld [vmem:[#allocation7 + $0x28] sm:$0xff]
    %v146 = vld [vmem:[#allocation7 + $0x30] sm:$0xff]
    %v147 = vld [vmem:[#allocation7 + $0x38] sm:$0xff]
    %v148 = vld [vmem:[#allocation7 + $0x40] sm:$0xff]
    %v149 = vld [vmem:[#allocation7 + $0x48] sm:$0xff]
    %v150 = vld [vmem:[#allocation7 + $0x50] sm:$0xff]
    %v151 = vld [vmem:[#allocation7 + $0x58] sm:$0xff]
    %v152 = vld [vmem:[#allocation7 + $0x60] sm:$0xff]
    %v153 = vld [vmem:[#allocation7 + $0x68] sm:$0xff]
    %v154 = vld [vmem:[#allocation7 + $0x70] sm:$0xff]
    %v155 = vld [vmem:[#allocation7 + $0x78] sm:$0xff]
    %v156 = vld [vmem:[#allocation7 + $0x80] sm:$0xff]
    %v157 = vld [vmem:[#allocation7 + $0x88] sm:$0xff]
    %v158 = vld [vmem:[#allocation7 + $0x90] sm:$0xff]
    %v159 = vld [vmem:[#allocation7 + $0x98] sm:$0xff]
    %v160 = vld [vmem:[#allocation7 + $0xa0] sm:$0xff]
    %v161 = vld [vmem:[#allocation7 + $0xa8] sm:$0xff]
    %v162 = vld [vmem:[#allocation7 + $0xb0] sm:$0xff]
    %v163 = vld [vmem:[#allocation7 + $0xb8] sm:$0xff]
    %v164 = vld [vmem:[#allocation7 + $0xc0] sm:$0xff]
    %v165 = vld [vmem:[#allocation7 + $0xc8] sm:$0xff]
    %v166 = vld [vmem:[#allocation7 + $0xd0] sm:$0xff]
    %v167 = vld [vmem:[#allocation7 + $0xd8] sm:$0xff]
    %v168 = vld [vmem:[#allocation7 + $0xe0] sm:$0xff]
    %v169 = vld [vmem:[#allocation7 + $0xe8] sm:$0xff]
    %v170 = vld [vmem:[#allocation7 + $0xf0] sm:$0xff]
    %v171 = vld [vmem:[#allocation7 + $0xf8] sm:$0xff]
    %v172 = vld [vmem:[#allocation7 + $0x100] sm:$0xff]
    %v173 = vld [vmem:[#allocation7 + $0x108] sm:$0xff]
    %v174 = vld [vmem:[#allocation7 + $0x110] sm:$0xff]
    %v175 = vld [vmem:[#allocation7 + $0x118] sm:$0xff]
    %v176 = vld [vmem:[#allocation7 + $0x120] sm:$0xff]
    %v177 = vld [vmem:[#allocation7 + $0x128] sm:$0xff]
    %v178 = vld [vmem:[#allocation7 + $0x130] sm:$0xff]
    %v179 = vld [vmem:[#allocation7 + $0x138] sm:$0xff]
    %v180 = vld [vmem:[#allocation7 + $0x140] sm:$0xff]
    %v181 = vld [vmem:[#allocation7 + $0x148] sm:$0xff]
    %v182 = vld [vmem:[#allocation7 + $0x150] sm:$0xff]
    %v183 = vld [vmem:[#allocation7 + $0x158] sm:$0xff]
    %v184 = vld [vmem:[#allocation7 + $0x160] sm:$0xff]
    %v185 = vld [vmem:[#allocation7 + $0x168] sm:$0xff]
    %v186 = vld [vmem:[#allocation7 + $0x170] sm:$0xff]
    %v187 = vld [vmem:[#allocation7 + $0x178] sm:$0xff]
    %v188 = vld [vmem:[#allocation7 + $0x180] sm:$0xff]
    %v189 = vld [vmem:[#allocation7 + $0x188] sm:$0xff]
    %v190 = vld [vmem:[#allocation7 + $0x190] sm:$0xff]
    %v191 = vld [vmem:[#allocation7 + $0x198] sm:$0xff]
    %v192 = vld [vmem:[#allocation7 + $0x1a0] sm:$0xff]
    %v193 = vld [vmem:[#allocation7 + $0x1a8] sm:$0xff]
    %v194 = vld [vmem:[#allocation7 + $0x1b0] sm:$0xff]
    %v195 = vld [vmem:[#allocation7 + $0x1b8] sm:$0xff]
    %v196 = vld [vmem:[#allocation7 + $0x1c0] sm:$0xff]
    %v197 = vld [vmem:[#allocation7 + $0x1c8] sm:$0xff]
    %v198 = vld [vmem:[#allocation7 + $0x1d0] sm:$0xff]
    %v199 = vld [vmem:[#allocation7 + $0x1d8] sm:$0xff]
    %v200 = vld [vmem:[#allocation7 + $0x1e0] sm:$0xff]
    %v201 = vld [vmem:[#allocation7 + $0x1e8] sm:$0xff]
    %v202 = vld [vmem:[#allocation7 + $0x1f0] sm:$0xff]
    %v203 = vld [vmem:[#allocation7 + $0x1f8] sm:$0xff]
    %204 = vmatprep.subr.mxu0 %v141
    %205 = vmatpush1.msra.mxu0 %v140
    %206 = vmatprep.subr.mxu0 %v145
    %207 = vmatpush1.msra.mxu0 %v144
    %208 = vmatprep.subr.mxu0 %v149
    %209 = vmatpush1.msra.mxu0 %v148
    %210 = vmatprep.subr.mxu0 %v153
    %211 = vmatpush1.msra.mxu0 %v152
    %212 = vmatprep.subr.mxu0 %v157
    %213 = vmatpush1.msra.mxu0 %v156
    %214 = vmatprep.subr.mxu0 %v161
    %215 = vmatpush1.msra.mxu0 %v160
    %216 = vmatprep.subr.mxu0 %v165
    %217 = vmatpush1.msra.mxu0 %v164
    %218 = vmatprep.subr.mxu0 %v169
    %219 = vmatpush1.msra.mxu0 %v168
    %220 = vmatprep.subr.mxu0 %v173
    %221 = vmatpush1.msra.mxu0 %v172
    %222 = vmatprep.subr.mxu0 %v177
    %223 = vmatpush1.msra.mxu0 %v176
    %224 = vmatprep.subr.mxu0 %v181
    %225 = vmatpush1.msra.mxu0 %v180
    %226 = vmatprep.subr.mxu0 %v185
    %227 = vmatpush1.msra.mxu0 %v184
    %228 = vmatprep.subr.mxu0 %v189
    %229 = vmatpush1.msra.mxu0 %v188
    %230 = vmatprep.subr.mxu0 %v193
    %231 = vmatpush1.msra.mxu0 %v192
    %232 = vmatprep.subr.mxu0 %v197
    %233 = vmatpush1.msra.mxu0 %v196
    %234 = vmatprep.subr.mxu0 %v201
    %235 = vmatpush1.msra.mxu0 %v200
    %236 = vmatprep.subr.mxu0 0.0
    %237 = vmatpush1.msra.mxu0 0.0
    %238 = vmatprep.subr.mxu0 0.0
    %239 = vmatpush1.msra.mxu0 0.0
    %240 = vmatprep.subr.mxu0 0.0
    %241 = vmatpush1.msra.mxu0 0.0
    %242 = vmatprep.subr.mxu0 0.0
    %243 = vmatpush1.msra.mxu0 0.0
    %244 = vmatprep.subr.mxu0 0.0
    %245 = vmatpush1.msra.mxu0 0.0
    %246 = vmatprep.subr.mxu0 0.0
    %247 = vmatpush1.msra.mxu0 0.0
    %248 = vmatprep.subr.mxu0 0.0
    %249 = vmatpush1.msra.mxu0 0.0
    %250 = vmatprep.subr.mxu0 0.0
    %251 = vmatpush1.msra.mxu0 0.0
    %252 = vmatprep.subr.mxu0 0.0
    %253 = vmatpush1.msra.mxu0 0.0
    %254 = vmatprep.subr.mxu0 0.0
    %255 = vmatpush1.msra.mxu0 0.0
    %256 = vmatprep.subr.mxu0 0.0
    %257 = vmatpush1.msra.mxu0 0.0
    %258 = vmatprep.subr.mxu0 0.0
    %259 = vmatpush1.msra.mxu0 0.0
    %260 = vmatprep.subr.mxu0 0.0
    %261 = vmatpush1.msra.mxu0 0.0
    %262 = vmatprep.subr.mxu0 0.0
    %263 = vmatpush1.msra.mxu0 0.0
    %264 = vmatprep.subr.mxu0 0.0
    %265 = vmatpush1.msra.mxu0 0.0
    %266 = vmatprep.subr.mxu0 0.0
    %267 = vmatpush1.msra.mxu0 0.0
    %268 = vmatprep.mubr.f32.mxu0 0.0
    %269 = vmatmul.mubr.f32.gmra.mrb[0].mxu0 0.0
    %v270 = vpop.f32.mrb[0].mxu0
    %v271 = vadd.f32 0.0, %v270
    %v272 = vpop.f32.mrb[0].mxu0
    %v273 = vadd.f32 0.0, %v272
    %274 = vdwg.mxu0
    %275 = vmatprep.subr.mxu0 %v143
    %276 = vmatpush1.msra.mxu0 %v142
    %277 = vmatprep.subr.mxu0 %v147
    %278 = vmatpush1.msra.mxu0 %v146
    %279 = vmatprep.subr.mxu0 %v151
    %280 = vmatpush1.msra.mxu0 %v150
    %281 = vmatprep.subr.mxu0 %v155
    %282 = vmatpush1.msra.mxu0 %v154
    %283 = vmatprep.subr.mxu0 %v159
    %284 = vmatpush1.msra.mxu0 %v158
    %285 = vmatprep.subr.mxu0 %v163
    %286 = vmatpush1.msra.mxu0 %v162
    %287 = vmatprep.subr.mxu0 %v167
    %288 = vmatpush1.msra.mxu0 %v166
    %289 = vmatprep.subr.mxu0 %v171
    %290 = vmatpush1.msra.mxu0 %v170
    %291 = vmatprep.subr.mxu0 %v175
    %292 = vmatpush1.msra.mxu0 %v174
    %293 = vmatprep.subr.mxu0 %v179
    %294 = vmatpush1.msra.mxu0 %v178
    %295 = vmatprep.subr.mxu0 %v183
    %296 = vmatpush1.msra.mxu0 %v182
    %297 = vmatprep.subr.mxu0 %v187
    %298 = vmatpush1.msra.mxu0 %v186
    %299 = vmatprep.subr.mxu0 %v191
    %300 = vmatpush1.msra.mxu0 %v190
    %301 = vmatprep.subr.mxu0 %v195
    %302 = vmatpush1.msra.mxu0 %v194
    %303 = vmatprep.subr.mxu0 %v199
    %304 = vmatpush1.msra.mxu0 %v198
    %305 = vmatprep.subr.mxu0 %v203
    %306 = vmatpush1.msra.mxu0 %v202
    %307 = vmatprep.subr.mxu0 0.0
    %308 = vmatpush1.msra.mxu0 0.0
    %309 = vmatprep.subr.mxu0 0.0
    %310 = vmatpush1.msra.mxu0 0.0
    %311 = vmatprep.subr.mxu0 0.0
    %312 = vmatpush1.msra.mxu0 0.0
    %313 = vmatprep.subr.mxu0 0.0
    %314 = vmatpush1.msra.mxu0 0.0
    %315 = vmatprep.subr.mxu0 0.0
    %316 = vmatpush1.msra.mxu0 0.0
    %317 = vmatprep.subr.mxu0 0.0
    %318 = vmatpush1.msra.mxu0 0.0
    %319 = vmatprep.subr.mxu0 0.0
    %320 = vmatpush1.msra.mxu0 0.0
    %321 = vmatprep.subr.mxu0 0.0
    %322 = vmatpush1.msra.mxu0 0.0
    %323 = vmatprep.subr.mxu0 0.0
    %324 = vmatpush1.msra.mxu0 0.0
    %325 = vmatprep.subr.mxu0 0.0
    %326 = vmatpush1.msra.mxu0 0.0
    %327 = vmatprep.subr.mxu0 0.0
    %328 = vmatpush1.msra.mxu0 0.0
    %329 = vmatprep.subr.mxu0 0.0
    %330 = vmatpush1.msra.mxu0 0.0
    %331 = vmatprep.subr.mxu0 0.0
    %332 = vmatpush1.msra.mxu0 0.0
    %333 = vmatprep.subr.mxu0 0.0
    %334 = vmatpush1.msra.mxu0 0.0
    %335 = vmatprep.subr.mxu0 0.0
    %336 = vmatpush1.msra.mxu0 0.0
    %337 = vmatprep.subr.mxu0 0.0
    %338 = vmatpush1.msra.mxu0 0.0
    %339 = vmatprep.mubr.f32.mxu0 0.0
    %340 = vmatmul.mubr.f32.gmra.mrb[0].mxu0 0.0
    %v341 = vpop.f32.mrb[0].mxu0
    %v342 = vadd.f32 0.0, %v341
    %v343 = vpop.f32.mrb[0].mxu0
    %v344 = vadd.f32 0.0, %v343
    %345 = vdwg.mxu0
    %v346 = vadd.f32 %v136, %v271
    %v347 = vadd.f32 %v137, %v273
    %v348 = vadd.f32 %v138, %v342
    %v349 = vadd.f32 %v139, %v344
    %v350 = vxor.u32 %v346, 2147483648
    %v351 = vxor.u32 %v347, 2147483648
    %v352 = vxor.u32 %v348, 2147483648
    %v353 = vmul.f32 %v350, 1.442695
    %v354 = vpow.pop %v353
    %v355 = vmul.f32 %v351, 1.442695
    %v356 = vpow.pop %v355
    %v357 = vmul.f32 %v352, 1.442695
    %v358 = vpow.pop %v357
    %v359 = vadd.f32 %v354, 1.0
    %v360 = vadd.f32 %v356, 1.0
    %v361 = vadd.f32 %v358, 1.0
    %v362 = vrcp.pop %v359
    %v363 = vmul.f32 1.0, %v362
    %v364 = vrcp.pop %v360
    %v365 = vmul.f32 1.0, %v364
    %v366 = vrcp.pop %v361
    %v367 = vmul.f32 1.0, %v366
    %v368 = vtanh.pop %v349
    %v369 = vmul.f32 %v365, 0.0
    %v370 = vmul.f32 %v363, %v368
    %v371 = vadd.f32 %v369, %v370
    %v372 = vtanh.pop %v371
    %v373 = vmul.f32 %v367, %v372
    %s374 = sld [smem:[#allocation2 + $0x80]]
    %s375 = sshra.s32 %s374, 3
    %s376 = sand.u32 %s374, 7
    %s377 = sshra.s32 %s374, 3
    %s378 = sand.u32 %s374, 7
    %s379 = smul.u32 %s375, 4
    %s380 = smul.u32 %s379, 8
    %s381 = sadd.s32 %s380, %s378
    %s382 = scalar_lea.vmem [#allocation6], %s381
    %v383 = vld [vmem:[%s382] ss:$8 sm:$0xf]
    %s384 = sld [smem:[#allocation2 + $0x81]]
    %s385 = sshra.s32 %s384, 3
    %s386 = sand.u32 %s384, 7
    %s387 = sshra.s32 %s384, 3
    %s388 = sand.u32 %s384, 7
    %s389 = smul.u32 %s385, 4
    %s390 = smul.u32 %s389, 8
    %s391 = sadd.s32 %s390, %s388
    %s392 = scalar_lea.vmem [#allocation6], %s391
    %v393 = vld [vmem:[%s392] ss:$8 sm:$0xf]
    %v395 = vlaneseq
    %v396 = vshrl.u32 %v395, 7
    %v397 = vsub.s32 0, %v396
    %v398 = vrot.slane %v383, %v397
    %v399 = vlaneseq
    %v400 = vshrl.u32 %v399, 7
    %v401 = vsub.s32 1, %v400
    %v402 = vrot.slane %v383, %v401
    %v403 = vlaneseq
    %v404 = vshrl.u32 %v403, 7
    %v405 = vsub.s32 2, %v404
    %v406 = vrot.slane %v383, %v405
    %v407 = vlaneseq
    %v408 = vshrl.u32 %v407, 7
    %v409 = vsub.s32 3, %v408
    %v410 = vrot.slane %v383, %v409
    %v416 = vlaneseq
    %v417 = vshrl.u32 %v416, 7
    %v418 = vsub.s32 0, %v417
    %v419 = vrot.slane %v393, %v418
    %v420 = vlaneseq
    %v421 = vshrl.u32 %v420, 7
    %v422 = vsub.s32 1, %v421
    %v423 = vrot.slane %v393, %v422
    %v424 = vlaneseq
    %v425 = vshrl.u32 %v424, 7
    %v426 = vsub.s32 2, %v425
    %v427 = vrot.slane %v393, %v426
    %v428 = vlaneseq
    %v429 = vshrl.u32 %v428, 7
    %v430 = vsub.s32 3, %v429
    %v431 = vrot.slane %v393, %v430
    %v436 = vsel %vm135, %v398, %v419
    %v437 = vsel %vm135, %v402, %v423
    %v438 = vsel %vm135, %v406, %v427
    %v439 = vsel %vm135, %v410, %v431
    %440 = vmatprep.subr.mxu0 %v141
    %441 = vmatpush1.msra.mxu0 %v140
    %442 = vmatprep.subr.mxu0 %v145
    %443 = vmatpush1.msra.mxu0 %v144
    %444 = vmatprep.subr.mxu0 %v149
    %445 = vmatpush1.msra.mxu0 %v148
    %446 = vmatprep.subr.mxu0 %v153
    %447 = vmatpush1.msra.mxu0 %v152
    %448 = vmatprep.subr.mxu0 %v157
    %449 = vmatpush1.msra.mxu0 %v156
    %450 = vmatprep.subr.mxu0 %v161
    %451 = vmatpush1.msra.mxu0 %v160
    %452 = vmatprep.subr.mxu0 %v165
    %453 = vmatpush1.msra.mxu0 %v164
    %454 = vmatprep.subr.mxu0 %v169
    %455 = vmatpush1.msra.mxu0 %v168
    %456 = vmatprep.subr.mxu0 %v173
    %457 = vmatpush1.msra.mxu0 %v172
    %458 = vmatprep.subr.mxu0 %v177
    %459 = vmatpush1.msra.mxu0 %v176
    %460 = vmatprep.subr.mxu0 %v181
    %461 = vmatpush1.msra.mxu0 %v180
    %462 = vmatprep.subr.mxu0 %v185
    %463 = vmatpush1.msra.mxu0 %v184
    %464 = vmatprep.subr.mxu0 %v189
    %465 = vmatpush1.msra.mxu0 %v188
    %466 = vmatprep.subr.mxu0 %v193
    %467 = vmatpush1.msra.mxu0 %v192
    %468 = vmatprep.subr.mxu0 %v197
    %469 = vmatpush1.msra.mxu0 %v196
    %470 = vmatprep.subr.mxu0 %v201
    %471 = vmatpush1.msra.mxu0 %v200
    %472 = vmatprep.subr.mxu0 0.0
    %473 = vmatpush1.msra.mxu0 0.0
    %474 = vmatprep.subr.mxu0 0.0
    %475 = vmatpush1.msra.mxu0 0.0
    %476 = vmatprep.subr.mxu0 0.0
    %477 = vmatpush1.msra.mxu0 0.0
    %478 = vmatprep.subr.mxu0 0.0
    %479 = vmatpush1.msra.mxu0 0.0
    %480 = vmatprep.subr.mxu0 0.0
    %481 = vmatpush1.msra.mxu0 0.0
    %482 = vmatprep.subr.mxu0 0.0
    %483 = vmatpush1.msra.mxu0 0.0
    %484 = vmatprep.subr.mxu0 0.0
    %485 = vmatpush1.msra.mxu0 0.0
    %486 = vmatprep.subr.mxu0 0.0
    %487 = vmatpush1.msra.mxu0 0.0
    %488 = vmatprep.subr.mxu0 0.0
    %489 = vmatpush1.msra.mxu0 0.0
    %490 = vmatprep.subr.mxu0 0.0
    %491 = vmatpush1.msra.mxu0 0.0
    %492 = vmatprep.subr.mxu0 0.0
    %493 = vmatpush1.msra.mxu0 0.0
    %494 = vmatprep.subr.mxu0 0.0
    %495 = vmatpush1.msra.mxu0 0.0
    %496 = vmatprep.subr.mxu0 0.0
    %497 = vmatpush1.msra.mxu0 0.0
    %498 = vmatprep.subr.mxu0 0.0
    %499 = vmatpush1.msra.mxu0 0.0
    %500 = vmatprep.subr.mxu0 0.0
    %501 = vmatpush1.msra.mxu0 0.0
    %502 = vmatprep.subr.mxu0 0.0
    %503 = vmatpush1.msra.mxu0 0.0
    %504 = vmatprep.mubr.f32.mxu0 0.0
    %505 = vmatmul.mubr.f32.gmra.mrb[0].mxu0 %v373
    %v506 = vpop.f32.mrb[0].mxu0
    %v507 = vadd.f32 0.0, %v506
    %v508 = vpop.f32.mrb[0].mxu0
    %v509 = vadd.f32 0.0, %v508
    %510 = vdwg.mxu0
    %511 = vmatprep.subr.mxu0 %v143
    %512 = vmatpush1.msra.mxu0 %v142
    %513 = vmatprep.subr.mxu0 %v147
    %514 = vmatpush1.msra.mxu0 %v146
    %515 = vmatprep.subr.mxu0 %v151
    %516 = vmatpush1.msra.mxu0 %v150
    %517 = vmatprep.subr.mxu0 %v155
    %518 = vmatpush1.msra.mxu0 %v154
    %519 = vmatprep.subr.mxu0 %v159
    %520 = vmatpush1.msra.mxu0 %v158
    %521 = vmatprep.subr.mxu0 %v163
    %522 = vmatpush1.msra.mxu0 %v162
    %523 = vmatprep.subr.mxu0 %v167
    %524 = vmatpush1.msra.mxu0 %v166
    %525 = vmatprep.subr.mxu0 %v171
    %526 = vmatpush1.msra.mxu0 %v170
    %527 = vmatprep.subr.mxu0 %v175
    %528 = vmatpush1.msra.mxu0 %v174
    %529 = vmatprep.subr.mxu0 %v179
    %530 = vmatpush1.msra.mxu0 %v178
    %531 = vmatprep.subr.mxu0 %v183
    %532 = vmatpush1.msra.mxu0 %v182
    %533 = vmatprep.subr.mxu0 %v187
    %534 = vmatpush1.msra.mxu0 %v186
    %535 = vmatprep.subr.mxu0 %v191
    %536 = vmatpush1.msra.mxu0 %v190
    %537 = vmatprep.subr.mxu0 %v195
    %538 = vmatpush1.msra.mxu0 %v194
    %539 = vmatprep.subr.mxu0 %v199
    %540 = vmatpush1.msra.mxu0 %v198
    %541 = vmatprep.subr.mxu0 %v203
    %542 = vmatpush1.msra.mxu0 %v202
    %543 = vmatprep.subr.mxu0 0.0
    %544 = vmatpush1.msra.mxu0 0.0
    %545 = vmatprep.subr.mxu0 0.0
    %546 = vmatpush1.msra.mxu0 0.0
    %547 = vmatprep.subr.mxu0 0.0
    %548 = vmatpush1.msra.mxu0 0.0
    %549 = vmatprep.subr.mxu0 0.0
    %550 = vmatpush1.msra.mxu0 0.0
    %551 = vmatprep.subr.mxu0 0.0
    %552 = vmatpush1.msra.mxu0 0.0
    %553 = vmatprep.subr.mxu0 0.0
    %554 = vmatpush1.msra.mxu0 0.0
    %555 = vmatprep.subr.mxu0 0.0
    %556 = vmatpush1.msra.mxu0 0.0
    %557 = vmatprep.subr.mxu0 0.0
    %558 = vmatpush1.msra.mxu0 0.0
    %559 = vmatprep.subr.mxu0 0.0
    %560 = vmatpush1.msra.mxu0 0.0
    %561 = vmatprep.subr.mxu0 0.0
    %562 = vmatpush1.msra.mxu0 0.0
    %563 = vmatprep.subr.mxu0 0.0
    %564 = vmatpush1.msra.mxu0 0.0
    %565 = vmatprep.subr.mxu0 0.0
    %566 = vmatpush1.msra.mxu0 0.0
    %567 = vmatprep.subr.mxu0 0.0
    %568 = vmatpush1.msra.mxu0 0.0
    %569 = vmatprep.subr.mxu0 0.0
    %570 = vmatpush1.msra.mxu0 0.0
    %571 = vmatprep.subr.mxu0 0.0
    %572 = vmatpush1.msra.mxu0 0.0
    %573 = vmatprep.subr.mxu0 0.0
    %574 = vmatpush1.msra.mxu0 0.0
    %575 = vmatprep.mubr.f32.mxu0 0.0
    %576 = vmatmul.mubr.f32.gmra.mrb[0].mxu0 %v373
    %v577 = vpop.f32.mrb[0].mxu0
    %v578 = vadd.f32 0.0, %v577
    %v579 = vpop.f32.mrb[0].mxu0
    %v580 = vadd.f32 0.0, %v579
    %581 = vdwg.mxu0
    %v582 = vadd.f32 %v436, %v507
    %v583 = vadd.f32 %v437, %v509
    %v584 = vadd.f32 %v438, %v578
    %v585 = vadd.f32 %v439, %v580
    %v586 = vxor.u32 %v582, 2147483648
    %v587 = vxor.u32 %v583, 2147483648
    %v588 = vxor.u32 %v584, 2147483648
    %v589 = vmul.f32 %v586, 1.442695
    %v590 = vpow.pop %v589
    %v591 = vmul.f32 %v587, 1.442695
    %v592 = vpow.pop %v591
    %v593 = vmul.f32 %v588, 1.442695
    %v594 = vpow.pop %v593
    %v595 = vadd.f32 %v590, 1.0
    %v596 = vadd.f32 %v592, 1.0
    %v597 = vadd.f32 %v594, 1.0
    %v598 = vrcp.pop %v595
    %v599 = vmul.f32 1.0, %v598
    %v600 = vrcp.pop %v596
    %v601 = vmul.f32 1.0, %v600
    %v602 = vrcp.pop %v597
    %v603 = vmul.f32 1.0, %v602
    %v604 = vtanh.pop %v585
    %v605 = vmul.f32 %v601, %v371
    %v606 = vmul.f32 %v599, %v604
    %v607 = vadd.f32 %v605, %v606
    %v608 = vtanh.pop %v607
    %v609 = vmul.f32 %v603, %v608
    %s610 = sld [smem:[#allocation2 + $0x100]]
    %s611 = sshra.s32 %s610, 3
    %s612 = sand.u32 %s610, 7
    %s613 = sshra.s32 %s610, 3
    %s614 = sand.u32 %s610, 7
    %s615 = smul.u32 %s611, 4
    %s616 = smul.u32 %s615, 8
    %s617 = sadd.s32 %s616, %s614
    %s618 = scalar_lea.vmem [#allocation6], %s617
    %v619 = vld [vmem:[%s618] ss:$8 sm:$0xf]
    %s620 = sld [smem:[#allocation2 + $0x101]]
    %s621 = sshra.s32 %s620, 3
    %s622 = sand.u32 %s620, 7
    %s623 = sshra.s32 %s620, 3
    %s624 = sand.u32 %s620, 7
    %s625 = smul.u32 %s621, 4
    %s626 = smul.u32 %s625, 8
    %s627 = sadd.s32 %s626, %s624
    %s628 = scalar_lea.vmem [#allocation6], %s627
    %v629 = vld [vmem:[%s628] ss:$8 sm:$0xf]
    %v631 = vlaneseq
    %v632 = vshrl.u32 %v631, 7
    %v633 = vsub.s32 0, %v632
    %v634 = vrot.slane %v619, %v633
    %v635 = vlaneseq
    %v636 = vshrl.u32 %v635, 7
    %v637 = vsub.s32 1, %v636
    %v638 = vrot.slane %v619, %v637
    %v639 = vlaneseq
    %v640 = vshrl.u32 %v639, 7
    %v641 = vsub.s32 2, %v640
    %v642 = vrot.slane %v619, %v641
    %v643 = vlaneseq
    %v644 = vshrl.u32 %v643, 7
    %v645 = vsub.s32 3, %v644
    %v646 = vrot.slane %v619, %v645
    %v652 = vlaneseq
    %v653 = vshrl.u32 %v652, 7
    %v654 = vsub.s32 0, %v653
    %v655 = vrot.slane %v629, %v654
    %v656 = vlaneseq
    %v657 = vshrl.u32 %v656, 7
    %v658 = vsub.s32 1, %v657
    %v659 = vrot.slane %v629, %v658
    %v660 = vlaneseq
    %v661 = vshrl.u32 %v660, 7
    %v662 = vsub.s32 2, %v661
    %v663 = vrot.slane %v629, %v662
    %v664 = vlaneseq
    %v665 = vshrl.u32 %v664, 7
    %v666 = vsub.s32 3, %v665
    %v667 = vrot.slane %v629, %v666
    %v672 = vsel %vm135, %v634, %v655
    %v673 = vsel %vm135, %v638, %v659
    %v674 = vsel %vm135, %v642, %v663
    %v675 = vsel %vm135, %v646, %v667
    %676 = vmatprep.subr.mxu0 %v141
    %677 = vmatpush1.msra.mxu0 %v140
    %678 = vmatprep.subr.mxu0 %v145
    %679 = vmatpush1.msra.mxu0 %v144
    %680 = vmatprep.subr.mxu0 %v149
    %681 = vmatpush1.msra.mxu0 %v148
    %682 = vmatprep.subr.mxu0 %v153
    %683 = vmatpush1.msra.mxu0 %v152
    %684 = vmatprep.subr.mxu0 %v157
    %685 = vmatpush1.msra.mxu0 %v156
    %686 = vmatprep.subr.mxu0 %v161
    %687 = vmatpush1.msra.mxu0 %v160
    %688 = vmatprep.subr.mxu0 %v165
    %689 = vmatpush1.msra.mxu0 %v164
    %690 = vmatprep.subr.mxu0 %v169
    %691 = vmatpush1.msra.mxu0 %v168
    %692 = vmatprep.subr.mxu0 %v173
    %693 = vmatpush1.msra.mxu0 %v172
    %694 = vmatprep.subr.mxu0 %v177
    %695 = vmatpush1.msra.mxu0 %v176
    %696 = vmatprep.subr.mxu0 %v181
    %697 = vmatpush1.msra.mxu0 %v180
    %698 = vmatprep.subr.mxu0 %v185
    %699 = vmatpush1.msra.mxu0 %v184
    %700 = vmatprep.subr.mxu0 %v189
    %701 = vmatpush1.msra.mxu0 %v188
    %702 = vmatprep.subr.mxu0 %v193
    %703 = vmatpush1.msra.mxu0 %v192
    %704 = vmatprep.subr.mxu0 %v197
    %705 = vmatpush1.msra.mxu0 %v196
    %706 = vmatprep.subr.mxu0 %v201
    %707 = vmatpush1.msra.mxu0 %v200
    %708 = vmatprep.subr.mxu0 0.0
    %709 = vmatpush1.msra.mxu0 0.0
    %710 = vmatprep.subr.mxu0 0.0
    %711 = vmatpush1.msra.mxu0 0.0
    %712 = vmatprep.subr.mxu0 0.0
    %713 = vmatpush1.msra.mxu0 0.0
    %714 = vmatprep.subr.mxu0 0.0
    %715 = vmatpush1.msra.mxu0 0.0
    %716 = vmatprep.subr.mxu0 0.0
    %717 = vmatpush1.msra.mxu0 0.0
    %718 = vmatprep.subr.mxu0 0.0
    %719 = vmatpush1.msra.mxu0 0.0
    %720 = vmatprep.subr.mxu0 0.0
    %721 = vmatpush1.msra.mxu0 0.0
    %722 = vmatprep.subr.mxu0 0.0
    %723 = vmatpush1.msra.mxu0 0.0
    %724 = vmatprep.subr.mxu0 0.0
    %725 = vmatpush1.msra.mxu0 0.0
    %726 = vmatprep.subr.mxu0 0.0
    %727 = vmatpush1.msra.mxu0 0.0
    %728 = vmatprep.subr.mxu0 0.0
    %729 = vmatpush1.msra.mxu0 0.0
    %730 = vmatprep.subr.mxu0 0.0
    %731 = vmatpush1.msra.mxu0 0.0
    %732 = vmatprep.subr.mxu0 0.0
    %733 = vmatpush1.msra.mxu0 0.0
    %734 = vmatprep.subr.mxu0 0.0
    %735 = vmatpush1.msra.mxu0 0.0
    %736 = vmatprep.subr.mxu0 0.0
    %737 = vmatpush1.msra.mxu0 0.0
    %738 = vmatprep.subr.mxu0 0.0
    %739 = vmatpush1.msra.mxu0 0.0
    %740 = vmatprep.mubr.f32.mxu0 0.0
    %741 = vmatmul.mubr.f32.gmra.mrb[0].mxu0 %v609
    %v742 = vpop.f32.mrb[0].mxu0
    %v743 = vadd.f32 0.0, %v742
    %v744 = vpop.f32.mrb[0].mxu0
    %v745 = vadd.f32 0.0, %v744
    %746 = vdwg.mxu0
    %747 = vmatprep.subr.mxu0 %v143
    %748 = vmatpush1.msra.mxu0 %v142
    %749 = vmatprep.subr.mxu0 %v147
    %750 = vmatpush1.msra.mxu0 %v146
    %751 = vmatprep.subr.mxu0 %v151
    %752 = vmatpush1.msra.mxu0 %v150
    %753 = vmatprep.subr.mxu0 %v155
    %754 = vmatpush1.msra.mxu0 %v154
    %755 = vmatprep.subr.mxu0 %v159
    %756 = vmatpush1.msra.mxu0 %v158
    %757 = vmatprep.subr.mxu0 %v163
    %758 = vmatpush1.msra.mxu0 %v162
    %759 = vmatprep.subr.mxu0 %v167
    %760 = vmatpush1.msra.mxu0 %v166
    %761 = vmatprep.subr.mxu0 %v171
    %762 = vmatpush1.msra.mxu0 %v170
    %763 = vmatprep.subr.mxu0 %v175
    %764 = vmatpush1.msra.mxu0 %v174
    %765 = vmatprep.subr.mxu0 %v179
    %766 = vmatpush1.msra.mxu0 %v178
    %767 = vmatprep.subr.mxu0 %v183
    %768 = vmatpush1.msra.mxu0 %v182
    %769 = vmatprep.subr.mxu0 %v187
    %770 = vmatpush1.msra.mxu0 %v186
    %771 = vmatprep.subr.mxu0 %v191
    %772 = vmatpush1.msra.mxu0 %v190
    %773 = vmatprep.subr.mxu0 %v195
    %774 = vmatpush1.msra.mxu0 %v194
    %775 = vmatprep.subr.mxu0 %v199
    %776 = vmatpush1.msra.mxu0 %v198
    %777 = vmatprep.subr.mxu0 %v203
    %778 = vmatpush1.msra.mxu0 %v202
    %779 = vmatprep.subr.mxu0 0.0
    %780 = vmatpush1.msra.mxu0 0.0
    %781 = vmatprep.subr.mxu0 0.0
    %782 = vmatpush1.msra.mxu0 0.0
    %783 = vmatprep.subr.mxu0 0.0
    %784 = vmatpush1.msra.mxu0 0.0
    %785 = vmatprep.subr.mxu0 0.0
    %786 = vmatpush1.msra.mxu0 0.0
    %787 = vmatprep.subr.mxu0 0.0
    %788 = vmatpush1.msra.mxu0 0.0
    %789 = vmatprep.subr.mxu0 0.0
    %790 = vmatpush1.msra.mxu0 0.0
    %791 = vmatprep.subr.mxu0 0.0
    %792 = vmatpush1.msra.mxu0 0.0
    %793 = vmatprep.subr.mxu0 0.0
    %794 = vmatpush1.msra.mxu0 0.0
    %795 = vmatprep.subr.mxu0 0.0
    %796 = vmatpush1.msra.mxu0 0.0
    %797 = vmatprep.subr.mxu0 0.0
    %798 = vmatpush1.msra.mxu0 0.0
    %799 = vmatprep.subr.mxu0 0.0
    %800 = vmatpush1.msra.mxu0 0.0
    %801 = vmatprep.subr.mxu0 0.0
    %802 = vmatpush1.msra.mxu0 0.0
    %803 = vmatprep.subr.mxu0 0.0
    %804 = vmatpush1.msra.mxu0 0.0
    %805 = vmatprep.subr.mxu0 0.0
    %806 = vmatpush1.msra.mxu0 0.0
    %807 = vmatprep.subr.mxu0 0.0
    %808 = vmatpush1.msra.mxu0 0.0
    %809 = vmatprep.subr.mxu0 0.0
    %810 = vmatpush1.msra.mxu0 0.0
    %811 = vmatprep.mubr.f32.mxu0 0.0
    %812 = vmatmul.mubr.f32.gmra.mrb[0].mxu0 %v609
    %v813 = vpop.f32.mrb[0].mxu0
    %v814 = vadd.f32 0.0, %v813
    %v815 = vpop.f32.mrb[0].mxu0
    %v816 = vadd.f32 0.0, %v815
    %817 = vdwg.mxu0
    %v818 = vadd.f32 %v672, %v743
    %v819 = vadd.f32 %v673, %v745
    %v820 = vadd.f32 %v674, %v814
    %v821 = vadd.f32 %v675, %v816
    %v822 = vxor.u32 %v818, 2147483648
    %v823 = vxor.u32 %v819, 2147483648
    %v824 = vxor.u32 %v820, 2147483648
    %v825 = vmul.f32 %v822, 1.442695
    %v826 = vpow.pop %v825
    %v827 = vmul.f32 %v823, 1.442695
    %v828 = vpow.pop %v827
    %v829 = vmul.f32 %v824, 1.442695
    %v830 = vpow.pop %v829
    %v831 = vadd.f32 %v826, 1.0
    %v832 = vadd.f32 %v828, 1.0
    %v833 = vadd.f32 %v830, 1.0
    %v834 = vrcp.pop %v831
    %v835 = vmul.f32 1.0, %v834
    %v836 = vrcp.pop %v832
    %v837 = vmul.f32 1.0, %v836
    %v838 = vrcp.pop %v833
    %v839 = vmul.f32 1.0, %v838
    %v840 = vtanh.pop %v821
    %v841 = vmul.f32 %v837, %v607
    %v842 = vmul.f32 %v835, %v840
    %v843 = vadd.f32 %v841, %v842
    %v844 = vtanh.pop %v843
    %v845 = vmul.f32 %v839, %v844
    %s846 = sld [smem:[#allocation2 + $0x180]]
    %s847 = sshra.s32 %s846, 3
    %s848 = sand.u32 %s846, 7
    %s849 = sshra.s32 %s846, 3
    %s850 = sand.u32 %s846, 7
    %s851 = smul.u32 %s847, 4
    %s852 = smul.u32 %s851, 8
    %s853 = sadd.s32 %s852, %s850
    %s854 = scalar_lea.vmem [#allocation6], %s853
    %v855 = vld [vmem:[%s854] ss:$8 sm:$0xf]
    %s856 = sld [smem:[#allocation2 + $0x181]]
    %s857 = sshra.s32 %s856, 3
    %s858 = sand.u32 %s856, 7
    %s859 = sshra.s32 %s856, 3
    %s860 = sand.u32 %s856, 7
    %s861 = smul.u32 %s857, 4
    %s862 = smul.u32 %s861, 8
    %s863 = sadd.s32 %s862, %s860
    %s864 = scalar_lea.vmem [#allocation6], %s863
    %v865 = vld [vmem:[%s864] ss:$8 sm:$0xf]
    %v867 = vlaneseq
    %v868 = vshrl.u32 %v867, 7
    %v869 = vsub.s32 0, %v868
    %v870 = vrot.slane %v855, %v869
    %v871 = vlaneseq
    %v872 = vshrl.u32 %v871, 7
    %v873 = vsub.s32 1, %v872
    %v874 = vrot.slane %v855, %v873
    %v875 = vlaneseq
    %v876 = vshrl.u32 %v875, 7
    %v877 = vsub.s32 2, %v876
    %v878 = vrot.slane %v855, %v877
    %v879 = vlaneseq
    %v880 = vshrl.u32 %v879, 7
    %v881 = vsub.s32 3, %v880
    %v882 = vrot.slane %v855, %v881
    %v888 = vlaneseq
    %v889 = vshrl.u32 %v888, 7
    %v890 = vsub.s32 0, %v889
    %v891 = vrot.slane %v865, %v890
    %v892 = vlaneseq
    %v893 = vshrl.u32 %v892, 7
    %v894 = vsub.s32 1, %v893
    %v895 = vrot.slane %v865, %v894
    %v896 = vlaneseq
    %v897 = vshrl.u32 %v896, 7
    %v898 = vsub.s32 2, %v897
    %v899 = vrot.slane %v865, %v898
    %v900 = vlaneseq
    %v901 = vshrl.u32 %v900, 7
    %v902 = vsub.s32 3, %v901
    %v903 = vrot.slane %v865, %v902
    %v908 = vsel %vm135, %v870, %v891
    %v909 = vsel %vm135, %v874, %v895
    %v910 = vsel %vm135, %v878, %v899
    %v911 = vsel %vm135, %v882, %v903
    %912 = vmatprep.subr.mxu0 %v141
    %913 = vmatpush1.msra.mxu0 %v140
    %914 = vmatprep.subr.mxu0 %v145
    %915 = vmatpush1.msra.mxu0 %v144
    %916 = vmatprep.subr.mxu0 %v149
    %917 = vmatpush1.msra.mxu0 %v148
    %918 = vmatprep.subr.mxu0 %v153
    %919 = vmatpush1.msra.mxu0 %v152
    %920 = vmatprep.subr.mxu0 %v157
    %921 = vmatpush1.msra.mxu0 %v156
    %922 = vmatprep.subr.mxu0 %v161
    %923 = vmatpush1.msra.mxu0 %v160
    %924 = vmatprep.subr.mxu0 %v165
    %925 = vmatpush1.msra.mxu0 %v164
    %926 = vmatprep.subr.mxu0 %v169
    %927 = vmatpush1.msra.mxu0 %v168
    %928 = vmatprep.subr.mxu0 %v173
    %929 = vmatpush1.msra.mxu0 %v172
    %930 = vmatprep.subr.mxu0 %v177
    %931 = vmatpush1.msra.mxu0 %v176
    %932 = vmatprep.subr.mxu0 %v181
    %933 = vmatpush1.msra.mxu0 %v180
    %934 = vmatprep.subr.mxu0 %v185
    %935 = vmatpush1.msra.mxu0 %v184
    %936 = vmatprep.subr.mxu0 %v189
    %937 = vmatpush1.msra.mxu0 %v188
    %938 = vmatprep.subr.mxu0 %v193
    %939 = vmatpush1.msra.mxu0 %v192
    %940 = vmatprep.subr.mxu0 %v197
    %941 = vmatpush1.msra.mxu0 %v196
    %942 = vmatprep.subr.mxu0 %v201
    %943 = vmatpush1.msra.mxu0 %v200
    %944 = vmatprep.subr.mxu0 0.0
    %945 = vmatpush1.msra.mxu0 0.0
    %946 = vmatprep.subr.mxu0 0.0
    %947 = vmatpush1.msra.mxu0 0.0
    %948 = vmatprep.subr.mxu0 0.0
    %949 = vmatpush1.msra.mxu0 0.0
    %950 = vmatprep.subr.mxu0 0.0
    %951 = vmatpush1.msra.mxu0 0.0
    %952 = vmatprep.subr.mxu0 0.0
    %953 = vmatpush1.msra.mxu0 0.0
    %954 = vmatprep.subr.mxu0 0.0
    %955 = vmatpush1.msra.mxu0 0.0
    %956 = vmatprep.subr.mxu0 0.0
    %957 = vmatpush1.msra.mxu0 0.0
    %958 = vmatprep.subr.mxu0 0.0
    %959 = vmatpush1.msra.mxu0 0.0
    %960 = vmatprep.subr.mxu0 0.0
    %961 = vmatpush1.msra.mxu0 0.0
    %962 = vmatprep.subr.mxu0 0.0
    %963 = vmatpush1.msra.mxu0 0.0
    %964 = vmatprep.subr.mxu0 0.0
    %965 = vmatpush1.msra.mxu0 0.0
    %966 = vmatprep.subr.mxu0 0.0
    %967 = vmatpush1.msra.mxu0 0.0
    %968 = vmatprep.subr.mxu0 0.0
    %969 = vmatpush1.msra.mxu0 0.0
    %970 = vmatprep.subr.mxu0 0.0
    %971 = vmatpush1.msra.mxu0 0.0
    %972 = vmatprep.subr.mxu0 0.0
    %973 = vmatpush1.msra.mxu0 0.0
    %974 = vmatprep.subr.mxu0 0.0
    %975 = vmatpush1.msra.mxu0 0.0
    %976 = vmatprep.mubr.f32.mxu0 0.0
    %977 = vmatmul.mubr.f32.gmra.mrb[0].mxu0 %v845
    %v978 = vpop.f32.mrb[0].mxu0
    %v979 = vadd.f32 0.0, %v978
    %v980 = vpop.f32.mrb[0].mxu0
    %v981 = vadd.f32 0.0, %v980
    %982 = vdwg.mxu0
    %983 = vmatprep.subr.mxu0 %v143
    %984 = vmatpush1.msra.mxu0 %v142
    %985 = vmatprep.subr.mxu0 %v147
    %986 = vmatpush1.msra.mxu0 %v146
    %987 = vmatprep.subr.mxu0 %v151
    %988 = vmatpush1.msra.mxu0 %v150
    %989 = vmatprep.subr.mxu0 %v155
    %990 = vmatpush1.msra.mxu0 %v154
    %991 = vmatprep.subr.mxu0 %v159
    %992 = vmatpush1.msra.mxu0 %v158
    %993 = vmatprep.subr.mxu0 %v163
    %994 = vmatpush1.msra.mxu0 %v162
    %995 = vmatprep.subr.mxu0 %v167
    %996 = vmatpush1.msra.mxu0 %v166
    %997 = vmatprep.subr.mxu0 %v171
    %998 = vmatpush1.msra.mxu0 %v170
    %999 = vmatprep.subr.mxu0 %v175
    %1000 = vmatpush1.msra.mxu0 %v174
    %1001 = vmatprep.subr.mxu0 %v179
    %1002 = vmatpush1.msra.mxu0 %v178
    %1003 = vmatprep.subr.mxu0 %v183
    %1004 = vmatpush1.msra.mxu0 %v182
    %1005 = vmatprep.subr.mxu0 %v187
    %1006 = vmatpush1.msra.mxu0 %v186
    %1007 = vmatprep.subr.mxu0 %v191
    %1008 = vmatpush1.msra.mxu0 %v190
    %1009 = vmatprep.subr.mxu0 %v195
    %1010 = vmatpush1.msra.mxu0 %v194
    %1011 = vmatprep.subr.mxu0 %v199
    %1012 = vmatpush1.msra.mxu0 %v198
    %1013 = vmatprep.subr.mxu0 %v203
    %1014 = vmatpush1.msra.mxu0 %v202
    %1015 = vmatprep.subr.mxu0 0.0
    %1016 = vmatpush1.msra.mxu0 0.0
    %1017 = vmatprep.subr.mxu0 0.0
    %1018 = vmatpush1.msra.mxu0 0.0
    %1019 = vmatprep.subr.mxu0 0.0
    %1020 = vmatpush1.msra.mxu0 0.0
    %1021 = vmatprep.subr.mxu0 0.0
    %1022 = vmatpush1.msra.mxu0 0.0
    %1023 = vmatprep.subr.mxu0 0.0
    %1024 = vmatpush1.msra.mxu0 0.0
    %1025 = vmatprep.subr.mxu0 0.0
    %1026 = vmatpush1.msra.mxu0 0.0
    %1027 = vmatprep.subr.mxu0 0.0
    %1028 = vmatpush1.msra.mxu0 0.0
    %1029 = vmatprep.subr.mxu0 0.0
    %1030 = vmatpush1.msra.mxu0 0.0
    %1031 = vmatprep.subr.mxu0 0.0
    %1032 = vmatpush1.msra.mxu0 0.0
    %1033 = vmatprep.subr.mxu0 0.0
    %1034 = vmatpush1.msra.mxu0 0.0
    %1035 = vmatprep.subr.mxu0 0.0
    %1036 = vmatpush1.msra.mxu0 0.0
    %1037 = vmatprep.subr.mxu0 0.0
    %1038 = vmatpush1.msra.mxu0 0.0
    %1039 = vmatprep.subr.mxu0 0.0
    %1040 = vmatpush1.msra.mxu0 0.0
    %1041 = vmatprep.subr.mxu0 0.0
    %1042 = vmatpush1.msra.mxu0 0.0
    %1043 = vmatprep.subr.mxu0 0.0
    %1044 = vmatpush1.msra.mxu0 0.0
    %1045 = vmatprep.subr.mxu0 0.0
    %1046 = vmatpush1.msra.mxu0 0.0
    %1047 = vmatprep.mubr.f32.mxu0 0.0
    %1048 = vmatmul.mubr.f32.gmra.mrb[0].mxu0 %v845
    %v1049 = vpop.f32.mrb[0].mxu0
    %v1050 = vadd.f32 0.0, %v1049
    %v1051 = vpop.f32.mrb[0].mxu0
    %v1052 = vadd.f32 0.0, %v1051
    %1053 = vdwg.mxu0
    %v1054 = vadd.f32 %v908, %v979
    %v1055 = vadd.f32 %v909, %v981
    %v1056 = vadd.f32 %v910, %v1050
    %v1057 = vadd.f32 %v911, %v1052
    %v1058 = vxor.u32 %v1054, 2147483648
    %v1059 = vxor.u32 %v1055, 2147483648
    %v1060 = vxor.u32 %v1056, 2147483648
    %v1061 = vmul.f32 %v1058, 1.442695
    %v1062 = vpow.pop %v1061
    %v1063 = vmul.f32 %v1059, 1.442695
    %v1064 = vpow.pop %v1063
    %v1065 = vmul.f32 %v1060, 1.442695
    %v1066 = vpow.pop %v1065
    %v1067 = vadd.f32 %v1062, 1.0
    %v1068 = vadd.f32 %v1064, 1.0
    %v1069 = vadd.f32 %v1066, 1.0
    %v1070 = vrcp.pop %v1067
    %v1071 = vmul.f32 1.0, %v1070
    %v1072 = vrcp.pop %v1068
    %v1073 = vmul.f32 1.0, %v1072
    %v1074 = vrcp.pop %v1069
    %v1075 = vmul.f32 1.0, %v1074
    %v1076 = vtanh.pop %v1057
    %v1077 = vmul.f32 %v1073, %v843
    %v1078 = vmul.f32 %v1071, %v1076
    %v1079 = vadd.f32 %v1077, %v1078
    %v1080 = vtanh.pop %v1079
    %v1081 = vmul.f32 %v1075, %v1080
    %s1082 = sld [smem:[#allocation2 + $0x200]]
    %s1083 = sshra.s32 %s1082, 3
    %s1084 = sand.u32 %s1082, 7
    %s1085 = sshra.s32 %s1082, 3
    %s1086 = sand.u32 %s1082, 7
    %s1087 = smul.u32 %s1083, 4
    %s1088 = smul.u32 %s1087, 8
    %s1089 = sadd.s32 %s1088, %s1086
    %s1090 = scalar_lea.vmem [#allocation6], %s1089
    %v1091 = vld [vmem:[%s1090] ss:$8 sm:$0xf]
    %s1092 = sld [smem:[#allocation2 + $0x201]]
    %s1093 = sshra.s32 %s1092, 3
    %s1094 = sand.u32 %s1092, 7
    %s1095 = sshra.s32 %s1092, 3
    %s1096 = sand.u32 %s1092, 7
    %s1097 = smul.u32 %s1093, 4
    %s1098 = smul.u32 %s1097, 8
    %s1099 = sadd.s32 %s1098, %s1096
    %s1100 = scalar_lea.vmem [#allocation6], %s1099
    %v1101 = vld [vmem:[%s1100] ss:$8 sm:$0xf]
    %v1103 = vlaneseq
    %v1104 = vshrl.u32 %v1103, 7
    %v1105 = vsub.s32 0, %v1104
    %v1106 = vrot.slane %v1091, %v1105
    %v1107 = vlaneseq
    %v1108 = vshrl.u32 %v1107, 7
    %v1109 = vsub.s32 1, %v1108
    %v1110 = vrot.slane %v1091, %v1109
    %v1111 = vlaneseq
    %v1112 = vshrl.u32 %v1111, 7
    %v1113 = vsub.s32 2, %v1112
    %v1114 = vrot.slane %v1091, %v1113
    %v1115 = vlaneseq
    %v1116 = vshrl.u32 %v1115, 7
    %v1117 = vsub.s32 3, %v1116
    %v1118 = vrot.slane %v1091, %v1117
    %v1124 = vlaneseq
    %v1125 = vshrl.u32 %v1124, 7
    %v1126 = vsub.s32 0, %v1125
    %v1127 = vrot.slane %v1101, %v1126
    %v1128 = vlaneseq
    %v1129 = vshrl.u32 %v1128, 7
    %v1130 = vsub.s32 1, %v1129
    %v1131 = vrot.slane %v1101, %v1130
    %v1132 = vlaneseq
    %v1133 = vshrl.u32 %v1132, 7
    %v1134 = vsub.s32 2, %v1133
    %v1135 = vrot.slane %v1101, %v1134
    %v1136 = vlaneseq
    %v1137 = vshrl.u32 %v1136, 7
    %v1138 = vsub.s32 3, %v1137
    %v1139 = vrot.slane %v1101, %v1138
    %v1144 = vsel %vm135, %v1106, %v1127
    %v1145 = vsel %vm135, %v1110, %v1131
    %v1146 = vsel %vm135, %v1114, %v1135
    %v1147 = vsel %vm135, %v1118, %v1139
    %1148 = vmatprep.subr.mxu0 %v141
    %1149 = vmatpush1.msra.mxu0 %v140
    %1150 = vmatprep.subr.mxu0 %v145
    %1151 = vmatpush1.msra.mxu0 %v144
    %1152 = vmatprep.subr.mxu0 %v149
    %1153 = vmatpush1.msra.mxu0 %v148
    %1154 = vmatprep.subr.mxu0 %v153
    %1155 = vmatpush1.msra.mxu0 %v152
    %1156 = vmatprep.subr.mxu0 %v157
    %1157 = vmatpush1.msra.mxu0 %v156
    %1158 = vmatprep.subr.mxu0 %v161
    %1159 = vmatpush1.msra.mxu0 %v160
    %1160 = vmatprep.subr.mxu0 %v165
    %1161 = vmatpush1.msra.mxu0 %v164
    %1162 = vmatprep.subr.mxu0 %v169
    %1163 = vmatpush1.msra.mxu0 %v168
    %1164 = vmatprep.subr.mxu0 %v173
    %1165 = vmatpush1.msra.mxu0 %v172
    %1166 = vmatprep.subr.mxu0 %v177
    %1167 = vmatpush1.msra.mxu0 %v176
    %1168 = vmatprep.subr.mxu0 %v181
    %1169 = vmatpush1.msra.mxu0 %v180
    %1170 = vmatprep.subr.mxu0 %v185
    %1171 = vmatpush1.msra.mxu0 %v184
    %1172 = vmatprep.subr.mxu0 %v189
    %1173 = vmatpush1.msra.mxu0 %v188
    %1174 = vmatprep.subr.mxu0 %v193
    %1175 = vmatpush1.msra.mxu0 %v192
    %1176 = vmatprep.subr.mxu0 %v197
    %1177 = vmatpush1.msra.mxu0 %v196
    %1178 = vmatprep.subr.mxu0 %v201
    %1179 = vmatpush1.msra.mxu0 %v200
    %1180 = vmatprep.subr.mxu0 0.0
    %1181 = vmatpush1.msra.mxu0 0.0
    %1182 = vmatprep.subr.mxu0 0.0
    %1183 = vmatpush1.msra.mxu0 0.0
    %1184 = vmatprep.subr.mxu0 0.0
    %1185 = vmatpush1.msra.mxu0 0.0
    %1186 = vmatprep.subr.mxu0 0.0
    %1187 = vmatpush1.msra.mxu0 0.0
    %1188 = vmatprep.subr.mxu0 0.0
    %1189 = vmatpush1.msra.mxu0 0.0
    %1190 = vmatprep.subr.mxu0 0.0
    %1191 = vmatpush1.msra.mxu0 0.0
    %1192 = vmatprep.subr.mxu0 0.0
    %1193 = vmatpush1.msra.mxu0 0.0
    %1194 = vmatprep.subr.mxu0 0.0
    %1195 = vmatpush1.msra.mxu0 0.0
    %1196 = vmatprep.subr.mxu0 0.0
    %1197 = vmatpush1.msra.mxu0 0.0
    %1198 = vmatprep.subr.mxu0 0.0
    %1199 = vmatpush1.msra.mxu0 0.0
    %1200 = vmatprep.subr.mxu0 0.0
    %1201 = vmatpush1.msra.mxu0 0.0
    %1202 = vmatprep.subr.mxu0 0.0
    %1203 = vmatpush1.msra.mxu0 0.0
    %1204 = vmatprep.subr.mxu0 0.0
    %1205 = vmatpush1.msra.mxu0 0.0
    %1206 = vmatprep.subr.mxu0 0.0
    %1207 = vmatpush1.msra.mxu0 0.0
    %1208 = vmatprep.subr.mxu0 0.0
    %1209 = vmatpush1.msra.mxu0 0.0
    %1210 = vmatprep.subr.mxu0 0.0
    %1211 = vmatpush1.msra.mxu0 0.0
    %1212 = vmatprep.mubr.f32.mxu0 0.0
    %1213 = vmatmul.mubr.f32.gmra.mrb[0].mxu0 %v1081
    %v1214 = vpop.f32.mrb[0].mxu0
    %v1215 = vadd.f32 0.0, %v1214
    %v1216 = vpop.f32.mrb[0].mxu0
    %v1217 = vadd.f32 0.0, %v1216
    %1218 = vdwg.mxu0
    %1219 = vmatprep.subr.mxu0 %v143
    %1220 = vmatpush1.msra.mxu0 %v142
    %1221 = vmatprep.subr.mxu0 %v147
    %1222 = vmatpush1.msra.mxu0 %v146
    %1223 = vmatprep.subr.mxu0 %v151
    %1224 = vmatpush1.msra.mxu0 %v150
    %1225 = vmatprep.subr.mxu0 %v155
    %1226 = vmatpush1.msra.mxu0 %v154
    %1227 = vmatprep.subr.mxu0 %v159
    %1228 = vmatpush1.msra.mxu0 %v158
    %1229 = vmatprep.subr.mxu0 %v163
    %1230 = vmatpush1.msra.mxu0 %v162
    %1231 = vmatprep.subr.mxu0 %v167
    %1232 = vmatpush1.msra.mxu0 %v166
    %1233 = vmatprep.subr.mxu0 %v171
    %1234 = vmatpush1.msra.mxu0 %v170
    %1235 = vmatprep.subr.mxu0 %v175
    %1236 = vmatpush1.msra.mxu0 %v174
    %1237 = vmatprep.subr.mxu0 %v179
    %1238 = vmatpush1.msra.mxu0 %v178
    %1239 = vmatprep.subr.mxu0 %v183
    %1240 = vmatpush1.msra.mxu0 %v182
    %1241 = vmatprep.subr.mxu0 %v187
    %1242 = vmatpush1.msra.mxu0 %v186
    %1243 = vmatprep.subr.mxu0 %v191
    %1244 = vmatpush1.msra.mxu0 %v190
    %1245 = vmatprep.subr.mxu0 %v195
    %1246 = vmatpush1.msra.mxu0 %v194
    %1247 = vmatprep.subr.mxu0 %v199
    %1248 = vmatpush1.msra.mxu0 %v198
    %1249 = vmatprep.subr.mxu0 %v203
    %1250 = vmatpush1.msra.mxu0 %v202
    %1251 = vmatprep.subr.mxu0 0.0
    %1252 = vmatpush1.msra.mxu0 0.0
    %1253 = vmatprep.subr.mxu0 0.0
    %1254 = vmatpush1.msra.mxu0 0.0
    %1255 = vmatprep.subr.mxu0 0.0
    %1256 = vmatpush1.msra.mxu0 0.0
    %1257 = vmatprep.subr.mxu0 0.0
    %1258 = vmatpush1.msra.mxu0 0.0
    %1259 = vmatprep.subr.mxu0 0.0
    %1260 = vmatpush1.msra.mxu0 0.0
    %1261 = vmatprep.subr.mxu0 0.0
    %1262 = vmatpush1.msra.mxu0 0.0
    %1263 = vmatprep.subr.mxu0 0.0
    %1264 = vmatpush1.msra.mxu0 0.0
    %1265 = vmatprep.subr.mxu0 0.0
    %1266 = vmatpush1.msra.mxu0 0.0
    %1267 = vmatprep.subr.mxu0 0.0
    %1268 = vmatpush1.msra.mxu0 0.0
    %1269 = vmatprep.subr.mxu0 0.0
    %1270 = vmatpush1.msra.mxu0 0.0
    %1271 = vmatprep.subr.mxu0 0.0
    %1272 = vmatpush1.msra.mxu0 0.0
    %1273 = vmatprep.subr.mxu0 0.0
    %1274 = vmatpush1.msra.mxu0 0.0
    %1275 = vmatprep.subr.mxu0 0.0
    %1276 = vmatpush1.msra.mxu0 0.0
    %1277 = vmatprep.subr.mxu0 0.0
    %1278 = vmatpush1.msra.mxu0 0.0
    %1279 = vmatprep.subr.mxu0 0.0
    %1280 = vmatpush1.msra.mxu0 0.0
    %1281 = vmatprep.subr.mxu0 0.0
    %1282 = vmatpush1.msra.mxu0 0.0
    %1283 = vmatprep.mubr.f32.mxu0 0.0
    %1284 = vmatmul.mubr.f32.gmra.mrb[0].mxu0 %v1081
    %v1285 = vpop.f32.mrb[0].mxu0
    %v1286 = vadd.f32 0.0, %v1285
    %v1287 = vpop.f32.mrb[0].mxu0
    %v1288 = vadd.f32 0.0, %v1287
    %1289 = vdwg.mxu0
    %v1290 = vadd.f32 %v1144, %v1215
    %v1291 = vadd.f32 %v1145, %v1217
    %v1292 = vadd.f32 %v1146, %v1286
    %v1293 = vadd.f32 %v1147, %v1288
    %v1294 = vxor.u32 %v1290, 2147483648
    %v1295 = vxor.u32 %v1291, 2147483648
    %v1296 = vxor.u32 %v1292, 2147483648
    %v1297 = vmul.f32 %v1294, 1.442695
    %v1298 = vpow.pop %v1297
    %v1299 = vmul.f32 %v1295, 1.442695
    %v1300 = vpow.pop %v1299
    %v1301 = vmul.f32 %v1296, 1.442695
    %v1302 = vpow.pop %v1301
    %v1303 = vadd.f32 %v1298, 1.0
    %v1304 = vadd.f32 %v1300, 1.0
    %v1305 = vadd.f32 %v1302, 1.0
    %v1306 = vrcp.pop %v1303
    %v1307 = vmul.f32 1.0, %v1306
    %v1308 = vrcp.pop %v1304
    %v1309 = vmul.f32 1.0, %v1308
    %v1310 = vrcp.pop %v1305
    %v1311 = vmul.f32 1.0, %v1310
    %v1312 = vtanh.pop %v1293
    %v1313 = vmul.f32 %v1309, %v1079
    %v1314 = vmul.f32 %v1307, %v1312
    %v1315 = vadd.f32 %v1313, %v1314
    %v1316 = vtanh.pop %v1315
    %v1317 = vmul.f32 %v1311, %v1316
    %s1318 = sld [smem:[#allocation2 + $0x280]]
    %s1319 = sshra.s32 %s1318, 3
    %s1320 = sand.u32 %s1318, 7
    %s1321 = sshra.s32 %s1318, 3
    %s1322 = sand.u32 %s1318, 7
    %s1323 = smul.u32 %s1319, 4
    %s1324 = smul.u32 %s1323, 8
    %s1325 = sadd.s32 %s1324, %s1322
    %s1326 = scalar_lea.vmem [#allocation6], %s1325
    %v1327 = vld [vmem:[%s1326] ss:$8 sm:$0xf]
    %s1328 = sld [smem:[#allocation2 + $0x281]]
    %s1329 = sshra.s32 %s1328, 3
    %s1330 = sand.u32 %s1328, 7
    %s1331 = sshra.s32 %s1328, 3
    %s1332 = sand.u32 %s1328, 7
    %s1333 = smul.u32 %s1329, 4
    %s1334 = smul.u32 %s1333, 8
    %s1335 = sadd.s32 %s1334, %s1332
    %s1336 = scalar_lea.vmem [#allocation6], %s1335
    %v1337 = vld [vmem:[%s1336] ss:$8 sm:$0xf]
    %v1339 = vlaneseq
    %v1340 = vshrl.u32 %v1339, 7
    %v1341 = vsub.s32 0, %v1340
    %v1342 = vrot.slane %v1327, %v1341
    %v1343 = vlaneseq
    %v1344 = vshrl.u32 %v1343, 7
    %v1345 = vsub.s32 1, %v1344
    %v1346 = vrot.slane %v1327, %v1345
    %v1347 = vlaneseq
    %v1348 = vshrl.u32 %v1347, 7
    %v1349 = vsub.s32 2, %v1348
    %v1350 = vrot.slane %v1327, %v1349
    %v1351 = vlaneseq
    %v1352 = vshrl.u32 %v1351, 7
    %v1353 = vsub.s32 3, %v1352
    %v1354 = vrot.slane %v1327, %v1353
    %v1360 = vlaneseq
    %v1361 = vshrl.u32 %v1360, 7
    %v1362 = vsub.s32 0, %v1361
    %v1363 = vrot.slane %v1337, %v1362
    %v1364 = vlaneseq
    %v1365 = vshrl.u32 %v1364, 7
    %v1366 = vsub.s32 1, %v1365
    %v1367 = vrot.slane %v1337, %v1366
    %v1368 = vlaneseq
    %v1369 = vshrl.u32 %v1368, 7
    %v1370 = vsub.s32 2, %v1369
    %v1371 = vrot.slane %v1337, %v1370
    %v1372 = vlaneseq
    %v1373 = vshrl.u32 %v1372, 7
    %v1374 = vsub.s32 3, %v1373
    %v1375 = vrot.slane %v1337, %v1374
    %v1380 = vsel %vm135, %v1342, %v1363
    %v1381 = vsel %vm135, %v1346, %v1367
    %v1382 = vsel %vm135, %v1350, %v1371
    %v1383 = vsel %vm135, %v1354, %v1375
    %1384 = vmatprep.subr.mxu0 %v141
    %1385 = vmatpush1.msra.mxu0 %v140
    %1386 = vmatprep.subr.mxu0 %v145
    %1387 = vmatpush1.msra.mxu0 %v144
    %1388 = vmatprep.subr.mxu0 %v149
    %1389 = vmatpush1.msra.mxu0 %v148
    %1390 = vmatprep.subr.mxu0 %v153
    %1391 = vmatpush1.msra.mxu0 %v152
    %1392 = vmatprep.subr.mxu0 %v157
    %1393 = vmatpush1.msra.mxu0 %v156
    %1394 = vmatprep.subr.mxu0 %v161
    %1395 = vmatpush1.msra.mxu0 %v160
    %1396 = vmatprep.subr.mxu0 %v165
    %1397 = vmatpush1.msra.mxu0 %v164
    %1398 = vmatprep.subr.mxu0 %v169
    %1399 = vmatpush1.msra.mxu0 %v168
    %1400 = vmatprep.subr.mxu0 %v173
    %1401 = vmatpush1.msra.mxu0 %v172
    %1402 = vmatprep.subr.mxu0 %v177
    %1403 = vmatpush1.msra.mxu0 %v176
    %1404 = vmatprep.subr.mxu0 %v181
    %1405 = vmatpush1.msra.mxu0 %v180
    %1406 = vmatprep.subr.mxu0 %v185
    %1407 = vmatpush1.msra.mxu0 %v184
    %1408 = vmatprep.subr.mxu0 %v189
    %1409 = vmatpush1.msra.mxu0 %v188
    %1410 = vmatprep.subr.mxu0 %v193
    %1411 = vmatpush1.msra.mxu0 %v192
    %1412 = vmatprep.subr.mxu0 %v197
    %1413 = vmatpush1.msra.mxu0 %v196
    %1414 = vmatprep.subr.mxu0 %v201
    %1415 = vmatpush1.msra.mxu0 %v200
    %1416 = vmatprep.subr.mxu0 0.0
    %1417 = vmatpush1.msra.mxu0 0.0
    %1418 = vmatprep.subr.mxu0 0.0
    %1419 = vmatpush1.msra.mxu0 0.0
    %1420 = vmatprep.subr.mxu0 0.0
    %1421 = vmatpush1.msra.mxu0 0.0
    %1422 = vmatprep.subr.mxu0 0.0
    %1423 = vmatpush1.msra.mxu0 0.0
    %1424 = vmatprep.subr.mxu0 0.0
    %1425 = vmatpush1.msra.mxu0 0.0
    %1426 = vmatprep.subr.mxu0 0.0
    %1427 = vmatpush1.msra.mxu0 0.0
    %1428 = vmatprep.subr.mxu0 0.0
    %1429 = vmatpush1.msra.mxu0 0.0
    %1430 = vmatprep.subr.mxu0 0.0
    %1431 = vmatpush1.msra.mxu0 0.0
    %1432 = vmatprep.subr.mxu0 0.0
    %1433 = vmatpush1.msra.mxu0 0.0
    %1434 = vmatprep.subr.mxu0 0.0
    %1435 = vmatpush1.msra.mxu0 0.0
    %1436 = vmatprep.subr.mxu0 0.0
    %1437 = vmatpush1.msra.mxu0 0.0
    %1438 = vmatprep.subr.mxu0 0.0
    %1439 = vmatpush1.msra.mxu0 0.0
    %1440 = vmatprep.subr.mxu0 0.0
    %1441 = vmatpush1.msra.mxu0 0.0
    %1442 = vmatprep.subr.mxu0 0.0
    %1443 = vmatpush1.msra.mxu0 0.0
    %1444 = vmatprep.subr.mxu0 0.0
    %1445 = vmatpush1.msra.mxu0 0.0
    %1446 = vmatprep.subr.mxu0 0.0
    %1447 = vmatpush1.msra.mxu0 0.0
    %1448 = vmatprep.mubr.f32.mxu0 0.0
    %1449 = vmatmul.mubr.f32.gmra.mrb[0].mxu0 %v1317
    %v1450 = vpop.f32.mrb[0].mxu0
    %v1451 = vadd.f32 0.0, %v1450
    %v1452 = vpop.f32.mrb[0].mxu0
    %v1453 = vadd.f32 0.0, %v1452
    %1454 = vdwg.mxu0
    %1455 = vmatprep.subr.mxu0 %v143
    %1456 = vmatpush1.msra.mxu0 %v142
    %1457 = vmatprep.subr.mxu0 %v147
    %1458 = vmatpush1.msra.mxu0 %v146
    %1459 = vmatprep.subr.mxu0 %v151
    %1460 = vmatpush1.msra.mxu0 %v150
    %1461 = vmatprep.subr.mxu0 %v155
    %1462 = vmatpush1.msra.mxu0 %v154
    %1463 = vmatprep.subr.mxu0 %v159
    %1464 = vmatpush1.msra.mxu0 %v158
    %1465 = vmatprep.subr.mxu0 %v163
    %1466 = vmatpush1.msra.mxu0 %v162
    %1467 = vmatprep.subr.mxu0 %v167
    %1468 = vmatpush1.msra.mxu0 %v166
    %1469 = vmatprep.subr.mxu0 %v171
    %1470 = vmatpush1.msra.mxu0 %v170
    %1471 = vmatprep.subr.mxu0 %v175
    %1472 = vmatpush1.msra.mxu0 %v174
    %1473 = vmatprep.subr.mxu0 %v179
    %1474 = vmatpush1.msra.mxu0 %v178
    %1475 = vmatprep.subr.mxu0 %v183
    %1476 = vmatpush1.msra.mxu0 %v182
    %1477 = vmatprep.subr.mxu0 %v187
    %1478 = vmatpush1.msra.mxu0 %v186
    %1479 = vmatprep.subr.mxu0 %v191
    %1480 = vmatpush1.msra.mxu0 %v190
    %1481 = vmatprep.subr.mxu0 %v195
    %1482 = vmatpush1.msra.mxu0 %v194
    %1483 = vmatprep.subr.mxu0 %v199
    %1484 = vmatpush1.msra.mxu0 %v198
    %1485 = vmatprep.subr.mxu0 %v203
    %1486 = vmatpush1.msra.mxu0 %v202
    %1487 = vmatprep.subr.mxu0 0.0
    %1488 = vmatpush1.msra.mxu0 0.0
    %1489 = vmatprep.subr.mxu0 0.0
    %1490 = vmatpush1.msra.mxu0 0.0
    %1491 = vmatprep.subr.mxu0 0.0
    %1492 = vmatpush1.msra.mxu0 0.0
    %1493 = vmatprep.subr.mxu0 0.0
    %1494 = vmatpush1.msra.mxu0 0.0
    %1495 = vmatprep.subr.mxu0 0.0
    %1496 = vmatpush1.msra.mxu0 0.0
    %1497 = vmatprep.subr.mxu0 0.0
    %1498 = vmatpush1.msra.mxu0 0.0
    %1499 = vmatprep.subr.mxu0 0.0
    %1500 = vmatpush1.msra.mxu0 0.0
    %1501 = vmatprep.subr.mxu0 0.0
    %1502 = vmatpush1.msra.mxu0 0.0
    %1503 = vmatprep.subr.mxu0 0.0
    %1504 = vmatpush1.msra.mxu0 0.0
    %1505 = vmatprep.subr.mxu0 0.0
    %1506 = vmatpush1.msra.mxu0 0.0
    %1507 = vmatprep.subr.mxu0 0.0
    %1508 = vmatpush1.msra.mxu0 0.0
    %1509 = vmatprep.subr.mxu0 0.0
    %1510 = vmatpush1.msra.mxu0 0.0
    %1511 = vmatprep.subr.mxu0 0.0
    %1512 = vmatpush1.msra.mxu0 0.0
    %1513 = vmatprep.subr.mxu0 0.0
    %1514 = vmatpush1.msra.mxu0 0.0
    %1515 = vmatprep.subr.mxu0 0.0
    %1516 = vmatpush1.msra.mxu0 0.0
    %1517 = vmatprep.subr.mxu0 0.0
    %1518 = vmatpush1.msra.mxu0 0.0
    %1519 = vmatprep.mubr.f32.mxu0 0.0
    %1520 = vmatmul.mubr.f32.gmra.mrb[0].mxu0 %v1317
    %v1521 = vpop.f32.mrb[0].mxu0
    %v1522 = vadd.f32 0.0, %v1521
    %v1523 = vpop.f32.mrb[0].mxu0
    %v1524 = vadd.f32 0.0, %v1523
    %1525 = vdwg.mxu0
    %v1526 = vadd.f32 %v1380, %v1451
    %v1527 = vadd.f32 %v1381, %v1453
    %v1528 = vadd.f32 %v1382, %v1522
    %v1529 = vadd.f32 %v1383, %v1524
    %v1530 = vxor.u32 %v1526, 2147483648
    %v1531 = vxor.u32 %v1527, 2147483648
    %v1532 = vxor.u32 %v1528, 2147483648
    %v1533 = vmul.f32 %v1530, 1.442695
    %v1534 = vpow.pop %v1533
    %v1535 = vmul.f32 %v1531, 1.442695
    %v1536 = vpow.pop %v1535
    %v1537 = vmul.f32 %v1532, 1.442695
    %v1538 = vpow.pop %v1537
    %v1539 = vadd.f32 %v1534, 1.0
    %v1540 = vadd.f32 %v1536, 1.0
    %v1541 = vadd.f32 %v1538, 1.0
    %v1542 = vrcp.pop %v1539
    %v1543 = vmul.f32 1.0, %v1542
    %v1544 = vrcp.pop %v1540
    %v1545 = vmul.f32 1.0, %v1544
    %v1546 = vrcp.pop %v1541
    %v1547 = vmul.f32 1.0, %v1546
    %v1548 = vtanh.pop %v1529
    %v1549 = vmul.f32 %v1545, %v1315
    %v1550 = vmul.f32 %v1543, %v1548
    %v1551 = vadd.f32 %v1549, %v1550
    %v1552 = vtanh.pop %v1551
    %v1553 = vmul.f32 %v1547, %v1552
    %s1554 = sld [smem:[#allocation2 + $0x300]]
    %s1555 = sshra.s32 %s1554, 3
    %s1556 = sand.u32 %s1554, 7
    %s1557 = sshra.s32 %s1554, 3
    %s1558 = sand.u32 %s1554, 7
    %s1559 = smul.u32 %s1555, 4
    %s1560 = smul.u32 %s1559, 8
    %s1561 = sadd.s32 %s1560, %s1558
    %s1562 = scalar_lea.vmem [#allocation6], %s1561
    %v1563 = vld [vmem:[%s1562] ss:$8 sm:$0xf]
    %s1564 = sld [smem:[#allocation2 + $0x301]]
    %s1565 = sshra.s32 %s1564, 3
    %s1566 = sand.u32 %s1564, 7
    %s1567 = sshra.s32 %s1564, 3
    %s1568 = sand.u32 %s1564, 7
    %s1569 = smul.u32 %s1565, 4
    %s1570 = smul.u32 %s1569, 8
    %s1571 = sadd.s32 %s1570, %s1568
    %s1572 = scalar_lea.vmem [#allocation6], %s1571
    %v1573 = vld [vmem:[%s1572] ss:$8 sm:$0xf]
    %v1575 = vlaneseq
    %v1576 = vshrl.u32 %v1575, 7
    %v1577 = vsub.s32 0, %v1576
    %v1578 = vrot.slane %v1563, %v1577
    %v1579 = vlaneseq
    %v1580 = vshrl.u32 %v1579, 7
    %v1581 = vsub.s32 1, %v1580
    %v1582 = vrot.slane %v1563, %v1581
    %v1583 = vlaneseq
    %v1584 = vshrl.u32 %v1583, 7
    %v1585 = vsub.s32 2, %v1584
    %v1586 = vrot.slane %v1563, %v1585
    %v1587 = vlaneseq
    %v1588 = vshrl.u32 %v1587, 7
    %v1589 = vsub.s32 3, %v1588
    %v1590 = vrot.slane %v1563, %v1589
    %v1596 = vlaneseq
    %v1597 = vshrl.u32 %v1596, 7
    %v1598 = vsub.s32 0, %v1597
    %v1599 = vrot.slane %v1573, %v1598
    %v1600 = vlaneseq
    %v1601 = vshrl.u32 %v1600, 7
    %v1602 = vsub.s32 1, %v1601
    %v1603 = vrot.slane %v1573, %v1602
    %v1604 = vlaneseq
    %v1605 = vshrl.u32 %v1604, 7
    %v1606 = vsub.s32 2, %v1605
    %v1607 = vrot.slane %v1573, %v1606
    %v1608 = vlaneseq
    %v1609 = vshrl.u32 %v1608, 7
    %v1610 = vsub.s32 3, %v1609
    %v1611 = vrot.slane %v1573, %v1610
    %v1616 = vsel %vm135, %v1578, %v1599
    %v1617 = vsel %vm135, %v1582, %v1603
    %v1618 = vsel %vm135, %v1586, %v1607
    %v1619 = vsel %vm135, %v1590, %v1611
    %1620 = vmatprep.subr.mxu0 %v141
    %1621 = vmatpush1.msra.mxu0 %v140
    %1622 = vmatprep.subr.mxu0 %v145
    %1623 = vmatpush1.msra.mxu0 %v144
    %1624 = vmatprep.subr.mxu0 %v149
    %1625 = vmatpush1.msra.mxu0 %v148
    %1626 = vmatprep.subr.mxu0 %v153
    %1627 = vmatpush1.msra.mxu0 %v152
    %1628 = vmatprep.subr.mxu0 %v157
    %1629 = vmatpush1.msra.mxu0 %v156
    %1630 = vmatprep.subr.mxu0 %v161
    %1631 = vmatpush1.msra.mxu0 %v160
    %1632 = vmatprep.subr.mxu0 %v165
    %1633 = vmatpush1.msra.mxu0 %v164
    %1634 = vmatprep.subr.mxu0 %v169
    %1635 = vmatpush1.msra.mxu0 %v168
    %1636 = vmatprep.subr.mxu0 %v173
    %1637 = vmatpush1.msra.mxu0 %v172
    %1638 = vmatprep.subr.mxu0 %v177
    %1639 = vmatpush1.msra.mxu0 %v176
    %1640 = vmatprep.subr.mxu0 %v181
    %1641 = vmatpush1.msra.mxu0 %v180
    %1642 = vmatprep.subr.mxu0 %v185
    %1643 = vmatpush1.msra.mxu0 %v184
    %1644 = vmatprep.subr.mxu0 %v189
    %1645 = vmatpush1.msra.mxu0 %v188
    %1646 = vmatprep.subr.mxu0 %v193
    %1647 = vmatpush1.msra.mxu0 %v192
    %1648 = vmatprep.subr.mxu0 %v197
    %1649 = vmatpush1.msra.mxu0 %v196
    %1650 = vmatprep.subr.mxu0 %v201
    %1651 = vmatpush1.msra.mxu0 %v200
    %1652 = vmatprep.subr.mxu0 0.0
    %1653 = vmatpush1.msra.mxu0 0.0
    %1654 = vmatprep.subr.mxu0 0.0
    %1655 = vmatpush1.msra.mxu0 0.0
    %1656 = vmatprep.subr.mxu0 0.0
    %1657 = vmatpush1.msra.mxu0 0.0
    %1658 = vmatprep.subr.mxu0 0.0
    %1659 = vmatpush1.msra.mxu0 0.0
    %1660 = vmatprep.subr.mxu0 0.0
    %1661 = vmatpush1.msra.mxu0 0.0
    %1662 = vmatprep.subr.mxu0 0.0
    %1663 = vmatpush1.msra.mxu0 0.0
    %1664 = vmatprep.subr.mxu0 0.0
    %1665 = vmatpush1.msra.mxu0 0.0
    %1666 = vmatprep.subr.mxu0 0.0
    %1667 = vmatpush1.msra.mxu0 0.0
    %1668 = vmatprep.subr.mxu0 0.0
    %1669 = vmatpush1.msra.mxu0 0.0
    %1670 = vmatprep.subr.mxu0 0.0
    %1671 = vmatpush1.msra.mxu0 0.0
    %1672 = vmatprep.subr.mxu0 0.0
    %1673 = vmatpush1.msra.mxu0 0.0
    %1674 = vmatprep.subr.mxu0 0.0
    %1675 = vmatpush1.msra.mxu0 0.0
    %1676 = vmatprep.subr.mxu0 0.0
    %1677 = vmatpush1.msra.mxu0 0.0
    %1678 = vmatprep.subr.mxu0 0.0
    %1679 = vmatpush1.msra.mxu0 0.0
    %1680 = vmatprep.subr.mxu0 0.0
    %1681 = vmatpush1.msra.mxu0 0.0
    %1682 = vmatprep.subr.mxu0 0.0
    %1683 = vmatpush1.msra.mxu0 0.0
    %1684 = vmatprep.mubr.f32.mxu0 0.0
    %1685 = vmatmul.mubr.f32.gmra.mrb[0].mxu0 %v1553
    %v1686 = vpop.f32.mrb[0].mxu0
    %v1687 = vadd.f32 0.0, %v1686
    %v1688 = vpop.f32.mrb[0].mxu0
    %v1689 = vadd.f32 0.0, %v1688
    %1690 = vdwg.mxu0
    %1691 = vmatprep.subr.mxu0 %v143
    %1692 = vmatpush1.msra.mxu0 %v142
    %1693 = vmatprep.subr.mxu0 %v147
    %1694 = vmatpush1.msra.mxu0 %v146
    %1695 = vmatprep.subr.mxu0 %v151
    %1696 = vmatpush1.msra.mxu0 %v150
    %1697 = vmatprep.subr.mxu0 %v155
    %1698 = vmatpush1.msra.mxu0 %v154
    %1699 = vmatprep.subr.mxu0 %v159
    %1700 = vmatpush1.msra.mxu0 %v158
    %1701 = vmatprep.subr.mxu0 %v163
    %1702 = vmatpush1.msra.mxu0 %v162
    %1703 = vmatprep.subr.mxu0 %v167
    %1704 = vmatpush1.msra.mxu0 %v166
    %1705 = vmatprep.subr.mxu0 %v171
    %1706 = vmatpush1.msra.mxu0 %v170
    %1707 = vmatprep.subr.mxu0 %v175
    %1708 = vmatpush1.msra.mxu0 %v174
    %1709 = vmatprep.subr.mxu0 %v179
    %1710 = vmatpush1.msra.mxu0 %v178
    %1711 = vmatprep.subr.mxu0 %v183
    %1712 = vmatpush1.msra.mxu0 %v182
    %1713 = vmatprep.subr.mxu0 %v187
    %1714 = vmatpush1.msra.mxu0 %v186
    %1715 = vmatprep.subr.mxu0 %v191
    %1716 = vmatpush1.msra.mxu0 %v190
    %1717 = vmatprep.subr.mxu0 %v195
    %1718 = vmatpush1.msra.mxu0 %v194
    %1719 = vmatprep.subr.mxu0 %v199
    %1720 = vmatpush1.msra.mxu0 %v198
    %1721 = vmatprep.subr.mxu0 %v203
    %1722 = vmatpush1.msra.mxu0 %v202
    %1723 = vmatprep.subr.mxu0 0.0
    %1724 = vmatpush1.msra.mxu0 0.0
    %1725 = vmatprep.subr.mxu0 0.0
    %1726 = vmatpush1.msra.mxu0 0.0
    %1727 = vmatprep.subr.mxu0 0.0
    %1728 = vmatpush1.msra.mxu0 0.0
    %1729 = vmatprep.subr.mxu0 0.0
    %1730 = vmatpush1.msra.mxu0 0.0
    %1731 = vmatprep.subr.mxu0 0.0
    %1732 = vmatpush1.msra.mxu0 0.0
    %1733 = vmatprep.subr.mxu0 0.0
    %1734 = vmatpush1.msra.mxu0 0.0
    %1735 = vmatprep.subr.mxu0 0.0
    %1736 = vmatpush1.msra.mxu0 0.0
    %1737 = vmatprep.subr.mxu0 0.0
    %1738 = vmatpush1.msra.mxu0 0.0
    %1739 = vmatprep.subr.mxu0 0.0
    %1740 = vmatpush1.msra.mxu0 0.0
    %1741 = vmatprep.subr.mxu0 0.0
    %1742 = vmatpush1.msra.mxu0 0.0
    %1743 = vmatprep.subr.mxu0 0.0
    %1744 = vmatpush1.msra.mxu0 0.0
    %1745 = vmatprep.subr.mxu0 0.0
    %1746 = vmatpush1.msra.mxu0 0.0
    %1747 = vmatprep.subr.mxu0 0.0
    %1748 = vmatpush1.msra.mxu0 0.0
    %1749 = vmatprep.subr.mxu0 0.0
    %1750 = vmatpush1.msra.mxu0 0.0
    %1751 = vmatprep.subr.mxu0 0.0
    %1752 = vmatpush1.msra.mxu0 0.0
    %1753 = vmatprep.subr.mxu0 0.0
    %1754 = vmatpush1.msra.mxu0 0.0
    %1755 = vmatprep.mubr.f32.mxu0 0.0
    %1756 = vmatmul.mubr.f32.gmra.mrb[0].mxu0 %v1553
    %v1757 = vpop.f32.mrb[0].mxu0
    %v1758 = vadd.f32 0.0, %v1757
    %v1759 = vpop.f32.mrb[0].mxu0
    %v1760 = vadd.f32 0.0, %v1759
    %1761 = vdwg.mxu0
    %v1762 = vadd.f32 %v1616, %v1687
    %v1763 = vadd.f32 %v1617, %v1689
    %v1764 = vadd.f32 %v1618, %v1758
    %v1765 = vadd.f32 %v1619, %v1760
    %v1766 = vxor.u32 %v1762, 2147483648
    %v1767 = vxor.u32 %v1763, 2147483648
    %v1768 = vxor.u32 %v1764, 2147483648
    %v1769 = vmul.f32 %v1766, 1.442695
    %v1770 = vpow.pop %v1769
    %v1771 = vmul.f32 %v1767, 1.442695
    %v1772 = vpow.pop %v1771
    %v1773 = vmul.f32 %v1768, 1.442695
    %v1774 = vpow.pop %v1773
    %v1775 = vadd.f32 %v1770, 1.0
    %v1776 = vadd.f32 %v1772, 1.0
    %v1777 = vadd.f32 %v1774, 1.0
    %v1778 = vrcp.pop %v1775
    %v1779 = vmul.f32 1.0, %v1778
    %v1780 = vrcp.pop %v1776
    %v1781 = vmul.f32 1.0, %v1780
    %v1782 = vrcp.pop %v1777
    %v1783 = vmul.f32 1.0, %v1782
    %v1784 = vtanh.pop %v1765
    %v1785 = vmul.f32 %v1781, %v1551
    %v1786 = vmul.f32 %v1779, %v1784
    %v1787 = vadd.f32 %v1785, %v1786
    %v1788 = vtanh.pop %v1787
    %v1789 = vmul.f32 %v1783, %v1788
    %s1790 = sld [smem:[#allocation2 + $0x380]]
    %s1791 = sshra.s32 %s1790, 3
    %s1792 = sand.u32 %s1790, 7
    %s1793 = sshra.s32 %s1790, 3
    %s1794 = sand.u32 %s1790, 7
    %s1795 = smul.u32 %s1791, 4
    %s1796 = smul.u32 %s1795, 8
    %s1797 = sadd.s32 %s1796, %s1794
    %s1798 = scalar_lea.vmem [#allocation6], %s1797
    %v1799 = vld [vmem:[%s1798] ss:$8 sm:$0xf]
    %s1800 = sld [smem:[#allocation2 + $0x381]]
    %s1801 = sshra.s32 %s1800, 3
    %s1802 = sand.u32 %s1800, 7
    %s1803 = sshra.s32 %s1800, 3
    %s1804 = sand.u32 %s1800, 7
    %s1805 = smul.u32 %s1801, 4
    %s1806 = smul.u32 %s1805, 8
    %s1807 = sadd.s32 %s1806, %s1804
    %s1808 = scalar_lea.vmem [#allocation6], %s1807
    %v1809 = vld [vmem:[%s1808] ss:$8 sm:$0xf]
    %v1811 = vlaneseq
    %v1812 = vshrl.u32 %v1811, 7
    %v1813 = vsub.s32 0, %v1812
    %v1814 = vrot.slane %v1799, %v1813
    %v1815 = vlaneseq
    %v1816 = vshrl.u32 %v1815, 7
    %v1817 = vsub.s32 1, %v1816
    %v1818 = vrot.slane %v1799, %v1817
    %v1819 = vlaneseq
    %v1820 = vshrl.u32 %v1819, 7
    %v1821 = vsub.s32 2, %v1820
    %v1822 = vrot.slane %v1799, %v1821
    %v1823 = vlaneseq
    %v1824 = vshrl.u32 %v1823, 7
    %v1825 = vsub.s32 3, %v1824
    %v1826 = vrot.slane %v1799, %v1825
    %v1832 = vlaneseq
    %v1833 = vshrl.u32 %v1832, 7
    %v1834 = vsub.s32 0, %v1833
    %v1835 = vrot.slane %v1809, %v1834
    %v1836 = vlaneseq
    %v1837 = vshrl.u32 %v1836, 7
    %v1838 = vsub.s32 1, %v1837
    %v1839 = vrot.slane %v1809, %v1838
    %v1840 = vlaneseq
    %v1841 = vshrl.u32 %v1840, 7
    %v1842 = vsub.s32 2, %v1841
    %v1843 = vrot.slane %v1809, %v1842
    %v1844 = vlaneseq
    %v1845 = vshrl.u32 %v1844, 7
    %v1846 = vsub.s32 3, %v1845
    %v1847 = vrot.slane %v1809, %v1846
    %v1852 = vsel %vm135, %v1814, %v1835
    %v1853 = vsel %vm135, %v1818, %v1839
    %v1854 = vsel %vm135, %v1822, %v1843
    %v1855 = vsel %vm135, %v1826, %v1847
    %1856 = vmatprep.subr.mxu0 %v141
    %1857 = vmatpush1.msra.mxu0 %v140
    %1858 = vmatprep.subr.mxu0 %v145
    %1859 = vmatpush1.msra.mxu0 %v144
    %1860 = vmatprep.subr.mxu0 %v149
    %1861 = vmatpush1.msra.mxu0 %v148
    %1862 = vmatprep.subr.mxu0 %v153
    %1863 = vmatpush1.msra.mxu0 %v152
    %1864 = vmatprep.subr.mxu0 %v157
    %1865 = vmatpush1.msra.mxu0 %v156
    %1866 = vmatprep.subr.mxu0 %v161
    %1867 = vmatpush1.msra.mxu0 %v160
    %1868 = vmatprep.subr.mxu0 %v165
    %1869 = vmatpush1.msra.mxu0 %v164
    %1870 = vmatprep.subr.mxu0 %v169
    %1871 = vmatpush1.msra.mxu0 %v168
    %1872 = vmatprep.subr.mxu0 %v173
    %1873 = vmatpush1.msra.mxu0 %v172
    %1874 = vmatprep.subr.mxu0 %v177
    %1875 = vmatpush1.msra.mxu0 %v176
    %1876 = vmatprep.subr.mxu0 %v181
    %1877 = vmatpush1.msra.mxu0 %v180
    %1878 = vmatprep.subr.mxu0 %v185
    %1879 = vmatpush1.msra.mxu0 %v184
    %1880 = vmatprep.subr.mxu0 %v189
    %1881 = vmatpush1.msra.mxu0 %v188
    %1882 = vmatprep.subr.mxu0 %v193
    %1883 = vmatpush1.msra.mxu0 %v192
    %1884 = vmatprep.subr.mxu0 %v197
    %1885 = vmatpush1.msra.mxu0 %v196
    %1886 = vmatprep.subr.mxu0 %v201
    %1887 = vmatpush1.msra.mxu0 %v200
    %1888 = vmatprep.subr.mxu0 0.0
    %1889 = vmatpush1.msra.mxu0 0.0
    %1890 = vmatprep.subr.mxu0 0.0
    %1891 = vmatpush1.msra.mxu0 0.0
    %1892 = vmatprep.subr.mxu0 0.0
    %1893 = vmatpush1.msra.mxu0 0.0
    %1894 = vmatprep.subr.mxu0 0.0
    %1895 = vmatpush1.msra.mxu0 0.0
    %1896 = vmatprep.subr.mxu0 0.0
    %1897 = vmatpush1.msra.mxu0 0.0
    %1898 = vmatprep.subr.mxu0 0.0
    %1899 = vmatpush1.msra.mxu0 0.0
    %1900 = vmatprep.subr.mxu0 0.0
    %1901 = vmatpush1.msra.mxu0 0.0
    %1902 = vmatprep.subr.mxu0 0.0
    %1903 = vmatpush1.msra.mxu0 0.0
    %1904 = vmatprep.subr.mxu0 0.0
    %1905 = vmatpush1.msra.mxu0 0.0
    %1906 = vmatprep.subr.mxu0 0.0
    %1907 = vmatpush1.msra.mxu0 0.0
    %1908 = vmatprep.subr.mxu0 0.0
    %1909 = vmatpush1.msra.mxu0 0.0
    %1910 = vmatprep.subr.mxu0 0.0
    %1911 = vmatpush1.msra.mxu0 0.0
    %1912 = vmatprep.subr.mxu0 0.0
    %1913 = vmatpush1.msra.mxu0 0.0
    %1914 = vmatprep.subr.mxu0 0.0
    %1915 = vmatpush1.msra.mxu0 0.0
    %1916 = vmatprep.subr.mxu0 0.0
    %1917 = vmatpush1.msra.mxu0 0.0
    %1918 = vmatprep.subr.mxu0 0.0
    %1919 = vmatpush1.msra.mxu0 0.0
    %1920 = vmatprep.mubr.f32.mxu0 0.0
    %1921 = vmatmul.mubr.f32.gmra.mrb[0].mxu0 %v1789
    %v1922 = vpop.f32.mrb[0].mxu0
    %v1923 = vadd.f32 0.0, %v1922
    %v1924 = vpop.f32.mrb[0].mxu0
    %v1925 = vadd.f32 0.0, %v1924
    %1926 = vdwg.mxu0
    %1927 = vmatprep.subr.mxu0 %v143
    %1928 = vmatpush1.msra.mxu0 %v142
    %1929 = vmatprep.subr.mxu0 %v147
    %1930 = vmatpush1.msra.mxu0 %v146
    %1931 = vmatprep.subr.mxu0 %v151
    %1932 = vmatpush1.msra.mxu0 %v150
    %1933 = vmatprep.subr.mxu0 %v155
    %1934 = vmatpush1.msra.mxu0 %v154
    %1935 = vmatprep.subr.mxu0 %v159
    %1936 = vmatpush1.msra.mxu0 %v158
    %1937 = vmatprep.subr.mxu0 %v163
    %1938 = vmatpush1.msra.mxu0 %v162
    %1939 = vmatprep.subr.mxu0 %v167
    %1940 = vmatpush1.msra.mxu0 %v166
    %1941 = vmatprep.subr.mxu0 %v171
    %1942 = vmatpush1.msra.mxu0 %v170
    %1943 = vmatprep.subr.mxu0 %v175
    %1944 = vmatpush1.msra.mxu0 %v174
    %1945 = vmatprep.subr.mxu0 %v179
    %1946 = vmatpush1.msra.mxu0 %v178
    %1947 = vmatprep.subr.mxu0 %v183
    %1948 = vmatpush1.msra.mxu0 %v182
    %1949 = vmatprep.subr.mxu0 %v187
    %1950 = vmatpush1.msra.mxu0 %v186
    %1951 = vmatprep.subr.mxu0 %v191
    %1952 = vmatpush1.msra.mxu0 %v190
    %1953 = vmatprep.subr.mxu0 %v195
    %1954 = vmatpush1.msra.mxu0 %v194
    %1955 = vmatprep.subr.mxu0 %v199
    %1956 = vmatpush1.msra.mxu0 %v198
    %1957 = vmatprep.subr.mxu0 %v203
    %1958 = vmatpush1.msra.mxu0 %v202
    %1959 = vmatprep.subr.mxu0 0.0
    %1960 = vmatpush1.msra.mxu0 0.0
    %1961 = vmatprep.subr.mxu0 0.0
    %1962 = vmatpush1.msra.mxu0 0.0
    %1963 = vmatprep.subr.mxu0 0.0
    %1964 = vmatpush1.msra.mxu0 0.0
    %1965 = vmatprep.subr.mxu0 0.0
    %1966 = vmatpush1.msra.mxu0 0.0
    %1967 = vmatprep.subr.mxu0 0.0
    %1968 = vmatpush1.msra.mxu0 0.0
    %1969 = vmatprep.subr.mxu0 0.0
    %1970 = vmatpush1.msra.mxu0 0.0
    %1971 = vmatprep.subr.mxu0 0.0
    %1972 = vmatpush1.msra.mxu0 0.0
    %1973 = vmatprep.subr.mxu0 0.0
    %1974 = vmatpush1.msra.mxu0 0.0
    %1975 = vmatprep.subr.mxu0 0.0
    %1976 = vmatpush1.msra.mxu0 0.0
    %1977 = vmatprep.subr.mxu0 0.0
    %1978 = vmatpush1.msra.mxu0 0.0
    %1979 = vmatprep.subr.mxu0 0.0
    %1980 = vmatpush1.msra.mxu0 0.0
    %1981 = vmatprep.subr.mxu0 0.0
    %1982 = vmatpush1.msra.mxu0 0.0
    %1983 = vmatprep.subr.mxu0 0.0
    %1984 = vmatpush1.msra.mxu0 0.0
    %1985 = vmatprep.subr.mxu0 0.0
    %1986 = vmatpush1.msra.mxu0 0.0
    %1987 = vmatprep.subr.mxu0 0.0
    %1988 = vmatpush1.msra.mxu0 0.0
    %1989 = vmatprep.subr.mxu0 0.0
    %1990 = vmatpush1.msra.mxu0 0.0
    %1991 = vmatprep.mubr.f32.mxu0 0.0
    %1992 = vmatmul.mubr.f32.gmra.mrb[0].mxu0 %v1789
    %v1993 = vpop.f32.mrb[0].mxu0
    %v1994 = vadd.f32 0.0, %v1993
    %v1995 = vpop.f32.mrb[0].mxu0
    %v1996 = vadd.f32 0.0, %v1995
    %1997 = vdwg.mxu0
    %v1998 = vadd.f32 %v1852, %v1923
    %v1999 = vadd.f32 %v1853, %v1925
    %v2000 = vadd.f32 %v1854, %v1994
    %v2001 = vadd.f32 %v1855, %v1996
    %v2002 = vxor.u32 %v1998, 2147483648
    %v2003 = vxor.u32 %v1999, 2147483648
    %v2004 = vxor.u32 %v2000, 2147483648
    %v2005 = vmul.f32 %v2002, 1.442695
    %v2006 = vpow.pop %v2005
    %v2007 = vmul.f32 %v2003, 1.442695
    %v2008 = vpow.pop %v2007
    %v2009 = vmul.f32 %v2004, 1.442695
    %v2010 = vpow.pop %v2009
    %v2011 = vadd.f32 %v2006, 1.0
    %v2012 = vadd.f32 %v2008, 1.0
    %v2013 = vadd.f32 %v2010, 1.0
    %v2014 = vrcp.pop %v2011
    %v2015 = vmul.f32 1.0, %v2014
    %v2016 = vrcp.pop %v2012
    %v2017 = vmul.f32 1.0, %v2016
    %v2018 = vrcp.pop %v2013
    %v2019 = vmul.f32 1.0, %v2018
    %v2020 = vtanh.pop %v2001
    %v2021 = vmul.f32 %v2017, %v1787
    %v2022 = vmul.f32 %v2015, %v2020
    %v2023 = vadd.f32 %v2021, %v2022
    %v2024 = vtanh.pop %v2023
    %v2025 = vmul.f32 %v2019, %v2024
    %v2026 = vld [vmem:[#allocation9] sm:$0xff]
    %v2027 = vld [vmem:[#allocation9 + $0x8] sm:$0xff]
    %v2028 = vld [vmem:[#allocation9 + $0x10] sm:$0xff]
    %v2029 = vld [vmem:[#allocation9 + $0x18] sm:$0xff]
    %v2030 = vld [vmem:[#allocation9 + $0x20] sm:$0xff]
    %v2031 = vld [vmem:[#allocation9 + $0x28] sm:$0xff]
    %v2032 = vld [vmem:[#allocation9 + $0x30] sm:$0xff]
    %v2033 = vld [vmem:[#allocation9 + $0x38] sm:$0xff]
    %v2034 = vld [vmem:[#allocation9 + $0x40] sm:$0xff]
    %v2035 = vld [vmem:[#allocation9 + $0x48] sm:$0xff]
    %v2036 = vld [vmem:[#allocation9 + $0x50] sm:$0xff]
    %v2037 = vld [vmem:[#allocation9 + $0x58] sm:$0xff]
    %v2038 = vld [vmem:[#allocation9 + $0x60] sm:$0xff]
    %v2039 = vld [vmem:[#allocation9 + $0x68] sm:$0xff]
    %v2040 = vld [vmem:[#allocation9 + $0x70] sm:$0xff]
    %v2041 = vld [vmem:[#allocation9 + $0x78] sm:$0xff]
    %v2042 = vld [vmem:[%s4] sm:$0x1]
    %v2044 = vlaneseq
    %v2045 = vshrl.u32 %v2044, 7
    %v2046 = vsub.s32 0, %v2045
    %v2047 = vrot.slane %v2042, %v2046
    %2049 = vmatprep.subr.mxu0 0.0
    %2050 = vmatpush1.msra.mxu0 %v2026
    %2051 = vmatprep.subr.mxu0 0.0
    %2052 = vmatpush1.msra.mxu0 %v2027
    %2053 = vmatprep.subr.mxu0 0.0
    %2054 = vmatpush1.msra.mxu0 %v2028
    %2055 = vmatprep.subr.mxu0 0.0
    %2056 = vmatpush1.msra.mxu0 %v2029
    %2057 = vmatprep.subr.mxu0 0.0
    %2058 = vmatpush1.msra.mxu0 %v2030
    %2059 = vmatprep.subr.mxu0 0.0
    %2060 = vmatpush1.msra.mxu0 %v2031
    %2061 = vmatprep.subr.mxu0 0.0
    %2062 = vmatpush1.msra.mxu0 %v2032
    %2063 = vmatprep.subr.mxu0 0.0
    %2064 = vmatpush1.msra.mxu0 %v2033
    %2065 = vmatprep.subr.mxu0 0.0
    %2066 = vmatpush1.msra.mxu0 %v2034
    %2067 = vmatprep.subr.mxu0 0.0
    %2068 = vmatpush1.msra.mxu0 %v2035
    %2069 = vmatprep.subr.mxu0 0.0
    %2070 = vmatpush1.msra.mxu0 %v2036
    %2071 = vmatprep.subr.mxu0 0.0
    %2072 = vmatpush1.msra.mxu0 %v2037
    %2073 = vmatprep.subr.mxu0 0.0
    %2074 = vmatpush1.msra.mxu0 %v2038
    %2075 = vmatprep.subr.mxu0 0.0
    %2076 = vmatpush1.msra.mxu0 %v2039
    %2077 = vmatprep.subr.mxu0 0.0
    %2078 = vmatpush1.msra.mxu0 %v2040
    %2079 = vmatprep.subr.mxu0 0.0
    %2080 = vmatpush1.msra.mxu0 %v2041
    %2081 = vmatprep.subr.mxu0 0.0
    %2082 = vmatpush1.msra.mxu0 0.0
    %2083 = vmatprep.subr.mxu0 0.0
    %2084 = vmatpush1.msra.mxu0 0.0
    %2085 = vmatprep.subr.mxu0 0.0
    %2086 = vmatpush1.msra.mxu0 0.0
    %2087 = vmatprep.subr.mxu0 0.0
    %2088 = vmatpush1.msra.mxu0 0.0
    %2089 = vmatprep.subr.mxu0 0.0
    %2090 = vmatpush1.msra.mxu0 0.0
    %2091 = vmatprep.subr.mxu0 0.0
    %2092 = vmatpush1.msra.mxu0 0.0
    %2093 = vmatprep.subr.mxu0 0.0
    %2094 = vmatpush1.msra.mxu0 0.0
    %2095 = vmatprep.subr.mxu0 0.0
    %2096 = vmatpush1.msra.mxu0 0.0
    %2097 = vmatprep.subr.mxu0 0.0
    %2098 = vmatpush1.msra.mxu0 0.0
    %2099 = vmatprep.subr.mxu0 0.0
    %2100 = vmatpush1.msra.mxu0 0.0
    %2101 = vmatprep.subr.mxu0 0.0
    %2102 = vmatpush1.msra.mxu0 0.0
    %2103 = vmatprep.subr.mxu0 0.0
    %2104 = vmatpush1.msra.mxu0 0.0
    %2105 = vmatprep.subr.mxu0 0.0
    %2106 = vmatpush1.msra.mxu0 0.0
    %2107 = vmatprep.subr.mxu0 0.0
    %2108 = vmatpush1.msra.mxu0 0.0
    %2109 = vmatprep.subr.mxu0 0.0
    %2110 = vmatpush1.msra.mxu0 0.0
    %2111 = vmatprep.subr.mxu0 0.0
    %2112 = vmatpush1.msra.mxu0 0.0
    %2113 = vmatprep.mubr.f32.mxu0 0.0
    %2114 = vmatmul.mubr.f32.gmra.mrb[0].mxu0 %v2025
    %v2115 = vpop.f32.mrb[0].mxu0
    %v2116 = vadd.f32 %v2047, %v2115
    %v2117 = vpop.f32.mrb[0].mxu0
    %2118 = vdwg.mxu0
    %2119 = vst [vmem:[#allocation10] sm:$0x3] %v2116
    // Predicated region
    $region38: #{tpu_custom_call.1} parent=1 // pred_check
      _
    $region39: #{tpu_custom_call.1} parent=1 // pred_check_branch
      %2121 = sbr.rel (0) target = $region41
    $region40: #{tpu_custom_call.1} parent=1 // pred_region
      %s2123 = ssub.s32 32, 32
      %2124 = vsyncadd [#allocation4], %s2123
      %s2126 = sshll.u32 [#allocation10], 4
      %s2127 = int_to_ptr.vmem [resolvable:$true] %s2126
      %2129 = dma.vmem_to_hbm [thread:$0]  %s2127, 32, %s5, [#allocation4]
    $region41: #{tpu_custom_call.1} parent=1 // pred_fallthru
      _
    // Predicated region
    $region42: #{tpu_custom_call.1} parent=1 // pred_check
      _
    $region43: #{tpu_custom_call.1} parent=1 // pred_check_branch
      %2131 = sbr.rel (0) target = $region45
    $region44: #{tpu_custom_call.1} parent=1 // pred_region
      %2132 = dma.done [#allocation4], 32
    $region45: #{tpu_custom_call.1} parent=1 // pred_fallthru
      _
    %2133 = vsyncpa [#allocation3], 1
    %2134 = vsyncpa [#allocation8], 1
    %2135 = vsyncpa [#allocation4], 1
    %2136 = vsyncpa [#allocation5], 1

</llo_original>
